<compile_context>
chip_gen: v5e
topology: v5e:2x2
jax: 0.10.0
libtpu: 0.0.40
codegen_flags: <defaults>
</compile_context>

<pallas_src>
import functools

import jax
import jax.numpy as jnp
from jax.experimental import pallas as pl
from jax.experimental.pallas import tpu as pltpu


# ---------------------------------------------------------------------------
# Fused kernel body: conv1d backbone + attention MIL pooling, BB bags per step.
# ---------------------------------------------------------------------------
def _forward_body(x_ref, pos_ref,
                  w1_ref, b1_ref, w2_ref, b2_ref,
                  v_ref, wa_ref, wc_ref, bc_ref,
                  logits_ref, attn_ref, *, compute_dtype):
    x = x_ref[...].astype(jnp.float32)                    # (BB, T, C_in)
    BB, T, _ = x.shape

    def im2col(y):
        """Per-bag 3-tap (pad=1) unfold along T: (BB, T, C) -> (BB*T, 3*C)."""
        c = y.shape[-1]
        z = jnp.zeros((BB, 1, c), jnp.float32)
        yp = jnp.concatenate([z, y, z], axis=1)           # (BB, T+2, C)
        cat = jnp.concatenate(
            [yp[:, 0:T], yp[:, 1:T + 1], yp[:, 2:T + 2]], axis=-1)  # (BB, T, 3C)
        return cat.reshape(BB * T, 3 * c)

    def mxu(a, b):
        return jnp.dot(a.astype(compute_dtype), b.astype(compute_dtype),
                       preferred_element_type=jnp.float32)

    # ---- backbone: Conv1d(C_in->H) + ReLU, single fused matmul ------------
    h = jnp.maximum(mxu(im2col(x), w1_ref[...]) + b1_ref[...], 0.0)      # (BB*T, H)
    # ---- backbone: Conv1d(H->D) + ReLU ------------------------------------
    e = jnp.maximum(mxu(im2col(h.reshape(BB, T, -1)), w2_ref[...])
                    + b2_ref[...], 0.0)                                  # (BB*T, D)
    D = e.shape[-1]

    e3 = e.reshape(BB, T, D)                               # per-bag embeddings
    if pos_ref is not None:
        e3 = e3 + pos_ref[...].astype(jnp.float32)

    # ---- pooling: attention over timesteps (per bag, lane-dense scores) ---
    a = jnp.tanh(mxu(e3.reshape(BB * T, D), v_ref[...]))   # (BB*T, A)
    a3 = a.reshape(BB, T, -1)
    s = jnp.sum(a3 * wa_ref[...][None], axis=-1)           # (BB, T)
    s = s - jnp.max(s, axis=-1, keepdims=True)
    p = jnp.exp(s)
    attn = p * pl.reciprocal(jnp.sum(p, axis=-1, keepdims=True), approx=True)

    # weighted bag embedding on the MXU: (BB,1,T) @ (BB,T,D) -> (BB,D)
    bag = jnp.einsum("bqt,btd->bqd",
                     attn[:, None, :].astype(compute_dtype),
                     e3.astype(compute_dtype),
                     preferred_element_type=jnp.float32).reshape(BB, D)
    logits = mxu(bag, wc_ref[...]) + bc_ref[...]           # (BB, n_cls)

    logits_ref[...] = logits.astype(logits_ref.dtype)
    attn_ref[...] = attn.astype(attn_ref.dtype)            # lane-dense (BB, T)


def _kernel_with_pos(x_ref, pos_ref, w1_ref, b1_ref, w2_ref, b2_ref,
                     v_ref, wa_ref, wc_ref, bc_ref, logits_ref, attn_ref,
                     *, compute_dtype):
    _forward_body(x_ref, pos_ref, w1_ref, b1_ref, w2_ref, b2_ref,
                  v_ref, wa_ref, wc_ref, bc_ref, logits_ref, attn_ref,
                  compute_dtype=compute_dtype)


def _kernel_no_pos(x_ref, w1_ref, b1_ref, w2_ref, b2_ref,
                   v_ref, wa_ref, wc_ref, bc_ref, logits_ref, attn_ref,
                   *, compute_dtype):
    _forward_body(x_ref, None, w1_ref, b1_ref, w2_ref, b2_ref,
                  v_ref, wa_ref, wc_ref, bc_ref, logits_ref, attn_ref,
                  compute_dtype=compute_dtype)


# ---------------------------------------------------------------------------
# Wrapper: layout transpose, conv-tap fusion of weights, pallas_call setup.
# ---------------------------------------------------------------------------
def _pick_block(B, want):
    """Largest divisor of B that is a multiple of 8 (or the full batch)."""
    for bb in range(min(want, B), 0, -1):
        if B % bb == 0 and (bb % 8 == 0 or bb == B):
            return bb
    return B


def build_model_forward(bags, params, pos=None, *, block_bags=8,
                        compute_dtype=jnp.bfloat16):
    """bags: (B, C_in, T) float32 (PyTorch NCT).  pos: (B, T, D) or None."""
    B, C_in, T = bags.shape
    w1, b1, w2, b2 = params["w1"], params["b1"], params["w2"], params["b2"]
    v, wa, wc, bc = params["v"], params["wa"], params["wc"], params["bc"]
    H, D, A, n_cls = w1.shape[2], w2.shape[2], v.shape[1], wc.shape[1]

    bb = _pick_block(B, block_bags)

    x = jnp.transpose(bags, (0, 2, 1))                     # (B, T, C_in) time-major
    w1f = w1.reshape(3 * C_in, H)                          # fused im2col weights
    w2f = w2.reshape(3 * H, D)
    wa_row = wa.reshape(1, A)

    has_pos = pos is not None
    full = lambda shape: pl.BlockSpec(shape, lambda i: (0,) * len(shape))

    in_specs = [pl.BlockSpec((bb, T, C_in), lambda i: (i, 0, 0))]
    inputs = [x]
    if has_pos:
        in_specs.append(pl.BlockSpec((bb, T, D), lambda i: (i, 0, 0)))
        inputs.append(pos)
    in_specs += [full((3 * C_in, H)), full((1, H)),
                 full((3 * H, D)), full((1, D)),
                 full((D, A)), full((1, A)),
                 full((D, n_cls)), full((1, n_cls))]
    inputs += [w1f, b1, w2f, b2, v, wa_row, wc, bc]

    kernel = functools.partial(_kernel_with_pos if has_pos else _kernel_no_pos,
                               compute_dtype=compute_dtype)

    logits, attn = pl.pallas_call(
        kernel,
        out_shape=(
            jax.ShapeDtypeStruct((B, n_cls), jnp.float32),
            jax.ShapeDtypeStruct((B, T), jnp.float32),       # lane-dense attention
        ),
        grid_spec=pltpu.PrefetchScalarGridSpec(
            num_scalar_prefetch=0,
            grid=(B // bb,),
            in_specs=in_specs,
            out_specs=[pl.BlockSpec((bb, n_cls), lambda i: (i, 0)),
                       pl.BlockSpec((bb, T), lambda i: (i, 0))],
        ),
        compiler_params=pltpu.CompilerParams(
            dimension_semantics=("parallel",)),
    )(*inputs)
    return logits, attn.reshape(B, T, 1)


# ---------------------------------------------------------------------------
# Pure-JAX reference (mirrors PyTorch Conv1d(pad=1) + attention MIL pooling).
# ---------------------------------------------------------------------------
def _reference(bags, params, pos=None):
    x = jnp.transpose(bags, (0, 2, 1))                     # (B, T, C_in)
    B, T, _ = x.shape

    def conv(y, w, b):                                     # y: (B,T,Cin) w: (3,Cin,Cout)
        yp = jnp.pad(y, ((0, 0), (1, 1), (0, 0)))
        out = sum(jnp.einsum("btc,cd->btd", yp[:, k:k + T], w[k]) for k in range(3))
        return jax.nn.relu(out + b[0])

    e = conv(conv(x, params["w1"], params["b1"]), params["w2"], params["b2"])
    if pos is not None:
        e = e + pos
    s = jnp.einsum("bta,ao->bto",
                   jnp.tanh(jnp.einsum("btd,da->bta", e, params["v"])),
                   params["wa"])                           # (B, T, 1)
    attn = jax.nn.softmax(s, axis=1)
    bag = jnp.sum(attn * e, axis=1)                        # (B, D)
    logits = bag @ params["wc"] + params["bc"][0]
    return logits, attn


if __name__ == "__main__":
    B, C_in, T = 16, 4, 16
    H, D, A, n_cls = 32, 32, 16, 3

    key = jax.random.PRNGKey(0)
    ks = jax.random.split(key, 10)
    params = {
        "w1": jax.random.normal(ks[0], (3, C_in, H), jnp.float32) * 0.2,
        "b1": jax.random.normal(ks[1], (1, H), jnp.float32) * 0.05,
        "w2": jax.random.normal(ks[2], (3, H, D), jnp.float32) * 0.1,
        "b2": jax.random.normal(ks[3], (1, D), jnp.float32) * 0.05,
        "v":  jax.random.normal(ks[4], (D, A), jnp.float32) * 0.2,
        "wa": jax.random.normal(ks[5], (A, 1), jnp.float32) * 0.2,
        "wc": jax.random.normal(ks[6], (D, n_cls), jnp.float32) * 0.2,
        "bc": jax.random.normal(ks[7], (1, n_cls), jnp.float32) * 0.05,
    }
    bags = jax.random.normal(ks[8], (B, C_in, T), jnp.float32)
    pos = jax.random.normal(ks[9], (B, T, D), jnp.float32) * 0.1

    ref_logits, ref_attn = _reference(bags, params, pos=pos)

    # bf16-MXU path (fast path for v6e/v7x; f32 accumulate + f32 softmax).
    logits, attn = build_model_forward(bags, params, pos=pos,
                                       compute_dtype=jnp.bfloat16)
    jax.block_until_ready((logits, attn))
    assert jnp.allclose(logits, ref_logits, atol=3e-2, rtol=3e-2)
    assert jnp.allclose(attn, ref_attn, atol=5e-3, rtol=3e-2)

    # f32 path: tight structural check.
    logits32, attn32 = build_model_forward(bags, params, pos=pos,
                                           compute_dtype=jnp.float32)
    jax.block_until_ready((logits32, attn32))
    assert jnp.allclose(logits32, ref_logits, atol=1e-3, rtol=1e-3)
    assert jnp.allclose(attn32, ref_attn, atol=1e-3, rtol=1e-3)

    # pos=None path (BulidModel.forward default): no-pos kernel variant,
    # no zero tensor materialized, no extra DMA.
    ref_logits0, ref_attn0 = _reference(bags, params, pos=None)
    logits0, attn0 = build_model_forward(bags, params, pos=None)
    jax.block_until_ready((logits0, attn0))
    assert jnp.allclose(logits0, ref_logits0, atol=3e-2, rtol=3e-2)
    assert jnp.allclose(attn0, ref_attn0, atol=5e-3, rtol=3e-2)

    print("KERNEL_OK")
</pallas_src>

<mosaic_0001>
module attributes {stable_mosaic.version = 11 : i64} {
  func.func @_kernel_with_pos(%arg0: i32, %arg1: memref<8x16x4xf32, #tpu.memory_space<vmem>>, %arg2: memref<8x16x32xf32, #tpu.memory_space<vmem>>, %arg3: memref<12x32xf32, #tpu.memory_space<vmem>>, %arg4: memref<1x32xf32, #tpu.memory_space<vmem>>, %arg5: memref<96x32xf32, #tpu.memory_space<vmem>>, %arg6: memref<1x32xf32, #tpu.memory_space<vmem>>, %arg7: memref<32x16xf32, #tpu.memory_space<vmem>>, %arg8: memref<1x16xf32, #tpu.memory_space<vmem>>, %arg9: memref<32x3xf32, #tpu.memory_space<vmem>>, %arg10: memref<1x3xf32, #tpu.memory_space<vmem>>, %arg11: memref<8x3xf32, #tpu.memory_space<vmem>>, %arg12: memref<8x16xf32, #tpu.memory_space<vmem>>) attributes {dimension_semantics = [#tpu.dimension_semantics<parallel>], iteration_bounds = array<i64: 2>, scalar_prefetch = 0 : i64, scratch_operands = 0 : i64, tpu.core_type = #tpu.core_type<tc>, window_params = [{transform_indices = @transform_0, window_bounds = array<i64: 8, 16, 4>}, {transform_indices = @transform_1, window_bounds = array<i64: 8, 16, 32>}, {pipeline_mode = #tpu.pipeline_mode<synchronous>, transform_indices = @transform_2, window_bounds = array<i64: 12, 32>}, {pipeline_mode = #tpu.pipeline_mode<synchronous>, transform_indices = @transform_3, window_bounds = array<i64: 1, 32>}, {pipeline_mode = #tpu.pipeline_mode<synchronous>, transform_indices = @transform_4, window_bounds = array<i64: 96, 32>}, {pipeline_mode = #tpu.pipeline_mode<synchronous>, transform_indices = @transform_5, window_bounds = array<i64: 1, 32>}, {pipeline_mode = #tpu.pipeline_mode<synchronous>, transform_indices = @transform_6, window_bounds = array<i64: 32, 16>}, {pipeline_mode = #tpu.pipeline_mode<synchronous>, transform_indices = @transform_7, window_bounds = array<i64: 1, 16>}, {pipeline_mode = #tpu.pipeline_mode<synchronous>, transform_indices = @transform_8, window_bounds = array<i64: 32, 3>}, {pipeline_mode = #tpu.pipeline_mode<synchronous>, transform_indices = @transform_9, window_bounds = array<i64: 1, 3>}, {transform_indices = @transform_10, window_bounds = array<i64: 8, 3>}, {transform_indices = @transform_11, window_bounds = array<i64: 8, 16>}]} {
    %c0 = arith.constant 0 : index
    %c0_0 = arith.constant 0 : index
    %c0_1 = arith.constant 0 : index
    %0 = vector.load %arg1[%c0, %c0_0, %c0_1] : memref<8x16x4xf32, #tpu.memory_space<vmem>>, vector<8x16x4xf32>
    %cst = arith.constant 0.000000e+00 : f32
    %1 = vector.broadcast %cst : f32 to vector<8x1x4xf32>
    %2 = tpu.concatenate %1, %0, %1 in 1 : vector<8x1x4xf32>, vector<8x16x4xf32>, vector<8x1x4xf32> -> vector<8x18x4xf32>
    %3 = vector.extract_strided_slice %2 {offsets = [0, 0, 0], sizes = [8, 16, 4], strides = [1, 1, 1]} : vector<8x18x4xf32> to vector<8x16x4xf32>
    %4 = vector.extract_strided_slice %2 {offsets = [0, 1, 0], sizes = [8, 16, 4], strides = [1, 1, 1]} : vector<8x18x4xf32> to vector<8x16x4xf32>
    %5 = vector.extract_strided_slice %2 {offsets = [0, 2, 0], sizes = [8, 16, 4], strides = [1, 1, 1]} : vector<8x18x4xf32> to vector<8x16x4xf32>
    %6 = tpu.concatenate %3, %4, %5 in 2 : vector<8x16x4xf32>, vector<8x16x4xf32>, vector<8x16x4xf32> -> vector<8x16x12xf32>
    %7 = vector.shape_cast %6 : vector<8x16x12xf32> to vector<128x12xf32>
    %c0_2 = arith.constant 0 : index
    %c0_3 = arith.constant 0 : index
    %8 = vector.load %arg3[%c0_2, %c0_3] : memref<12x32xf32, #tpu.memory_space<vmem>>, vector<12x32xf32>
    %9 = arith.truncf %7 : vector<128x12xf32> to vector<128x12xbf16>
    %10 = arith.truncf %8 : vector<12x32xf32> to vector<12x32xbf16>
    %cst_4 = arith.constant dense<0.000000e+00> : vector<128x32xf32>
    %11 = tpu.matmul %9, %10, %cst_4 {dimension_numbers = #tpu.dot_dimension_numbers<[1], [0], [0], [1], [0, 0, 1, 1], [], []>} : vector<128x12xbf16>, vector<12x32xbf16>, vector<128x32xf32> -> vector<128x32xf32>
    %c0_5 = arith.constant 0 : index
    %c0_6 = arith.constant 0 : index
    %12 = vector.load %arg4[%c0_5, %c0_6] : memref<1x32xf32, #tpu.memory_space<vmem>>, vector<1x32xf32>
    %13 = vector.broadcast %12 : vector<1x32xf32> to vector<128x32xf32>
    %14 = arith.addf %11, %13 : vector<128x32xf32>
    %cst_7 = arith.constant 0.000000e+00 : f32
    %15 = vector.broadcast %cst_7 : f32 to vector<128x32xf32>
    %16 = arith.maximumf %14, %15 : vector<128x32xf32>
    %17 = vector.shape_cast %16 : vector<128x32xf32> to vector<8x16x32xf32>
    %cst_8 = arith.constant 0.000000e+00 : f32
    %18 = vector.broadcast %cst_8 : f32 to vector<8x1x32xf32>
    %19 = tpu.concatenate %18, %17, %18 in 1 : vector<8x1x32xf32>, vector<8x16x32xf32>, vector<8x1x32xf32> -> vector<8x18x32xf32>
    %20 = vector.extract_strided_slice %19 {offsets = [0, 0, 0], sizes = [8, 16, 32], strides = [1, 1, 1]} : vector<8x18x32xf32> to vector<8x16x32xf32>
    %21 = vector.extract_strided_slice %19 {offsets = [0, 1, 0], sizes = [8, 16, 32], strides = [1, 1, 1]} : vector<8x18x32xf32> to vector<8x16x32xf32>
    %22 = vector.extract_strided_slice %19 {offsets = [0, 2, 0], sizes = [8, 16, 32], strides = [1, 1, 1]} : vector<8x18x32xf32> to vector<8x16x32xf32>
    %23 = tpu.concatenate %20, %21, %22 in 2 : vector<8x16x32xf32>, vector<8x16x32xf32>, vector<8x16x32xf32> -> vector<8x16x96xf32>
    %24 = vector.shape_cast %23 : vector<8x16x96xf32> to vector<128x96xf32>
    %c0_9 = arith.constant 0 : index
    %c0_10 = arith.constant 0 : index
    %25 = vector.load %arg5[%c0_9, %c0_10] : memref<96x32xf32, #tpu.memory_space<vmem>>, vector<96x32xf32>
    %26 = arith.truncf %24 : vector<128x96xf32> to vector<128x96xbf16>
    %27 = arith.truncf %25 : vector<96x32xf32> to vector<96x32xbf16>
    %cst_11 = arith.constant dense<0.000000e+00> : vector<128x32xf32>
    %28 = tpu.matmul %26, %27, %cst_11 {dimension_numbers = #tpu.dot_dimension_numbers<[1], [0], [0], [1], [0, 0, 1, 1], [], []>} : vector<128x96xbf16>, vector<96x32xbf16>, vector<128x32xf32> -> vector<128x32xf32>
    %c0_12 = arith.constant 0 : index
    %c0_13 = arith.constant 0 : index
    %29 = vector.load %arg6[%c0_12, %c0_13] : memref<1x32xf32, #tpu.memory_space<vmem>>, vector<1x32xf32>
    %30 = vector.broadcast %29 : vector<1x32xf32> to vector<128x32xf32>
    %31 = arith.addf %28, %30 : vector<128x32xf32>
    %cst_14 = arith.constant 0.000000e+00 : f32
    %32 = vector.broadcast %cst_14 : f32 to vector<128x32xf32>
    %33 = arith.maximumf %31, %32 : vector<128x32xf32>
    %34 = vector.shape_cast %33 : vector<128x32xf32> to vector<8x16x32xf32>
    %c0_15 = arith.constant 0 : index
    %c0_16 = arith.constant 0 : index
    %c0_17 = arith.constant 0 : index
    %35 = vector.load %arg2[%c0_15, %c0_16, %c0_17] : memref<8x16x32xf32, #tpu.memory_space<vmem>>, vector<8x16x32xf32>
    %36 = arith.addf %34, %35 : vector<8x16x32xf32>
    %37 = vector.shape_cast %36 : vector<8x16x32xf32> to vector<128x32xf32>
    %c0_18 = arith.constant 0 : index
    %c0_19 = arith.constant 0 : index
    %38 = vector.load %arg7[%c0_18, %c0_19] : memref<32x16xf32, #tpu.memory_space<vmem>>, vector<32x16xf32>
    %39 = arith.truncf %37 : vector<128x32xf32> to vector<128x32xbf16>
    %40 = arith.truncf %38 : vector<32x16xf32> to vector<32x16xbf16>
    %cst_20 = arith.constant dense<0.000000e+00> : vector<128x16xf32>
    %41 = tpu.matmul %39, %40, %cst_20 {dimension_numbers = #tpu.dot_dimension_numbers<[1], [0], [0], [1], [0, 0, 1, 1], [], []>} : vector<128x32xbf16>, vector<32x16xbf16>, vector<128x16xf32> -> vector<128x16xf32>
    %42 = math.tanh %41 : vector<128x16xf32>
    %43 = vector.shape_cast %42 : vector<128x16xf32> to vector<8x16x16xf32>
    %c0_21 = arith.constant 0 : index
    %c0_22 = arith.constant 0 : index
    %44 = vector.load %arg8[%c0_21, %c0_22] : memref<1x16xf32, #tpu.memory_space<vmem>>, vector<1x16xf32>
    %45 = vector.shape_cast %44 : vector<1x16xf32> to vector<1x1x16xf32>
    %46 = vector.broadcast %45 : vector<1x1x16xf32> to vector<8x16x16xf32>
    %47 = arith.mulf %43, %46 : vector<8x16x16xf32>
    %cst_23 = arith.constant dense<0.000000e+00> : vector<8x16xf32>
    %48 = vector.multi_reduction <add>, %47, %cst_23 [2] : vector<8x16x16xf32> to vector<8x16xf32>
    %cst_24 = arith.constant dense<0xFF800000> : vector<8xf32>
    %49 = vector.multi_reduction <maximumf>, %48, %cst_24 [1] : vector<8x16xf32> to vector<8xf32>
    %50 = vector.shape_cast %49 : vector<8xf32> to vector<8x1xf32>
    %51 = vector.broadcast %50 : vector<8x1xf32> to vector<8x16xf32>
    %52 = arith.subf %48, %51 : vector<8x16xf32>
    %53 = math.exp %52 : vector<8x16xf32>
    %cst_25 = arith.constant dense<0.000000e+00> : vector<8xf32>
    %54 = vector.multi_reduction <add>, %53, %cst_25 [1] : vector<8x16xf32> to vector<8xf32>
    %55 = vector.shape_cast %54 : vector<8xf32> to vector<8x1xf32>
    %56 = tpu.reciprocal %55 {approx = true} : vector<8x1xf32> -> vector<8x1xf32>
    %57 = vector.broadcast %56 : vector<8x1xf32> to vector<8x16xf32>
    %58 = arith.mulf %53, %57 : vector<8x16xf32>
    %59 = vector.shape_cast %58 : vector<8x16xf32> to vector<8x1x16xf32>
    %60 = arith.truncf %59 : vector<8x1x16xf32> to vector<8x1x16xbf16>
    %61 = arith.truncf %36 : vector<8x16x32xf32> to vector<8x16x32xbf16>
    "tpu.trace_start"() <{level = 10 : i32, message = "bqt,btd->bqd"}> : () -> ()
    %cst_26 = arith.constant dense<0.000000e+00> : vector<8x1x32xf32>
    %62 = tpu.matmul %60, %61, %cst_26 {dimension_numbers = #tpu.dot_dimension_numbers<[2], [1], [1], [2], [0, 0, 0, 1, 1, 2], [0], [0]>} : vector<8x1x16xbf16>, vector<8x16x32xbf16>, vector<8x1x32xf32> -> vector<8x1x32xf32>
    "tpu.trace_stop"() : () -> ()
    %63 = vector.shape_cast %62 : vector<8x1x32xf32> to vector<8x32xf32>
    %c0_27 = arith.constant 0 : index
    %c0_28 = arith.constant 0 : index
    %64 = vector.load %arg9[%c0_27, %c0_28] : memref<32x3xf32, #tpu.memory_space<vmem>>, vector<32x3xf32>
    %65 = arith.truncf %63 : vector<8x32xf32> to vector<8x32xbf16>
    %66 = arith.truncf %64 : vector<32x3xf32> to vector<32x3xbf16>
    %cst_29 = arith.constant dense<0.000000e+00> : vector<8x3xf32>
    %67 = tpu.matmul %65, %66, %cst_29 {dimension_numbers = #tpu.dot_dimension_numbers<[1], [0], [0], [1], [0, 0, 1, 1], [], []>} : vector<8x32xbf16>, vector<32x3xbf16>, vector<8x3xf32> -> vector<8x3xf32>
    %c0_30 = arith.constant 0 : index
    %c0_31 = arith.constant 0 : index
    %68 = vector.load %arg10[%c0_30, %c0_31] : memref<1x3xf32, #tpu.memory_space<vmem>>, vector<1x3xf32>
    %69 = vector.broadcast %68 : vector<1x3xf32> to vector<8x3xf32>
    %70 = arith.addf %67, %69 : vector<8x3xf32>
    %c0_32 = arith.constant 0 : index
    %c0_33 = arith.constant 0 : index
    %71 = vector.load %arg11[%c0_32, %c0_33] : memref<8x3xf32, #tpu.memory_space<vmem>>, vector<8x3xf32>
    tpu.vector_store %arg11[%c0_32, %c0_33], %70 {strides = array<i32>} : memref<8x3xf32, #tpu.memory_space<vmem>>, vector<8x3xf32>,
    %c0_34 = arith.constant 0 : index
    %c0_35 = arith.constant 0 : index
    %72 = vector.load %arg12[%c0_34, %c0_35] : memref<8x16xf32, #tpu.memory_space<vmem>>, vector<8x16xf32>
    tpu.vector_store %arg12[%c0_34, %c0_35], %58 {strides = array<i32>} : memref<8x16xf32, #tpu.memory_space<vmem>>, vector<8x16xf32>,
    return
  }
  func.func @transform_0(%arg0: i32) -> (i32, i32, i32) {
    %c0_i32 = arith.constant 0 : i32
    %c0_i32_0 = arith.constant 0 : i32
    %c0_i32_1 = arith.constant 0 : i32
    return %arg0, %c0_i32, %c0_i32_0 : i32, i32, i32
  }
  func.func @transform_1(%arg0: i32) -> (i32, i32, i32) {
    %c0_i32 = arith.constant 0 : i32
    %c0_i32_0 = arith.constant 0 : i32
    %c0_i32_1 = arith.constant 0 : i32
    return %arg0, %c0_i32, %c0_i32_0 : i32, i32, i32
  }
  func.func @transform_2(%arg0: i32) -> (i32, i32) {
    %c0_i32 = arith.constant 0 : i32
    %c0_i32_0 = arith.constant 0 : i32
    %c0_i32_1 = arith.constant 0 : i32
    return %c0_i32, %c0_i32_0 : i32, i32
  }
  func.func @transform_3(%arg0: i32) -> (i32, i32) {
    %c0_i32 = arith.constant 0 : i32
    %c0_i32_0 = arith.constant 0 : i32
    %c0_i32_1 = arith.constant 0 : i32
    return %c0_i32, %c0_i32_0 : i32, i32
  }
  func.func @transform_4(%arg0: i32) -> (i32, i32) {
    %c0_i32 = arith.constant 0 : i32
    %c0_i32_0 = arith.constant 0 : i32
    %c0_i32_1 = arith.constant 0 : i32
    return %c0_i32, %c0_i32_0 : i32, i32
  }
  func.func @transform_5(%arg0: i32) -> (i32, i32) {
    %c0_i32 = arith.constant 0 : i32
    %c0_i32_0 = arith.constant 0 : i32
    %c0_i32_1 = arith.constant 0 : i32
    return %c0_i32, %c0_i32_0 : i32, i32
  }
  func.func @transform_6(%arg0: i32) -> (i32, i32) {
    %c0_i32 = arith.constant 0 : i32
    %c0_i32_0 = arith.constant 0 : i32
    %c0_i32_1 = arith.constant 0 : i32
    return %c0_i32, %c0_i32_0 : i32, i32
  }
  func.func @transform_7(%arg0: i32) -> (i32, i32) {
    %c0_i32 = arith.constant 0 : i32
    %c0_i32_0 = arith.constant 0 : i32
    %c0_i32_1 = arith.constant 0 : i32
    return %c0_i32, %c0_i32_0 : i32, i32
  }
  func.func @transform_8(%arg0: i32) -> (i32, i32) {
    %c0_i32 = arith.constant 0 : i32
    %c0_i32_0 = arith.constant 0 : i32
    %c0_i32_1 = arith.constant 0 : i32
    return %c0_i32, %c0_i32_0 : i32, i32
  }
  func.func @transform_9(%arg0: i32) -> (i32, i32) {
    %c0_i32 = arith.constant 0 : i32
    %c0_i32_0 = arith.constant 0 : i32
    %c0_i32_1 = arith.constant 0 : i32
    return %c0_i32, %c0_i32_0 : i32, i32
  }
  func.func @transform_10(%arg0: i32) -> (i32, i32) {
    %c0_i32 = arith.constant 0 : i32
    %c0_i32_0 = arith.constant 0 : i32
    return %arg0, %c0_i32 : i32, i32
  }
  func.func @transform_11(%arg0: i32) -> (i32, i32) {
    %c0_i32 = arith.constant 0 : i32
    %c0_i32_0 = arith.constant 0 : i32
    return %arg0, %c0_i32 : i32, i32
  }
}

</mosaic_0001>

<llo_original>
// kernel: tpu_custom_call.1
$region0: #{tpu_custom_call.1}
  #allocation0 [shape = 'u32[]', space=smem, size = 0x4, offset = 0x4, fixed_abs, tag = 'smem constant byte address 0x4 - core index']
  #allocation1 [shape = 'u32[72,128]{1,0:T(1,128)}', space=vmem, size = 0x9000, scoped, tag = 'internal scratch']
  %s0 = inlined_call_operand.vmem [shape: f32[16,16,4], index: 0, kind: input, shape index: {}]
  %s1 = inlined_call_operand.vmem [shape: f32[16,16,32], index: 1, kind: input, shape index: {}]
  %s2 = inlined_call_operand.vmem [shape: f32[12,32], index: 2, kind: input, shape index: {}]
  %s3 = inlined_call_operand.vmem [shape: f32[1,32], index: 3, kind: input, shape index: {}]
  %s4 = inlined_call_operand.vmem [shape: f32[96,32], index: 4, kind: input, shape index: {}]
  %s5 = inlined_call_operand.vmem [shape: f32[1,32], index: 5, kind: input, shape index: {}]
  %s6 = inlined_call_operand.vmem [shape: f32[32,16], index: 6, kind: input, shape index: {}]
  %s7 = inlined_call_operand.vmem [shape: f32[1,16], index: 7, kind: input, shape index: {}]
  %s8 = inlined_call_operand.vmem [shape: f32[32,3], index: 8, kind: input, shape index: {}]
  %s9 = inlined_call_operand.vmem [shape: f32[1,3], index: 9, kind: input, shape index: {}]
  %s10 = inlined_call_operand.vmem [shape: f32[16,3], index: 10, kind: output, shape index: {0}]
  %s11 = inlined_call_operand.hbm [shape: f32[16,16], index: 11, kind: output, shape index: {1}]
  %12 = xla_tuple %s10, %s11
  %s13 = sld [smem:[#allocation0]]
  $region81: #{tpu_custom_call.1} parent=0
    _
  %s15 = ssub.s32 1, %s13
  %s16 = scalar_select 0, %s15, %s13
  $region1: #{tpu_custom_call.1} parent=0
    #allocation2 [shape = 'u8[8192]{0}', space=vmem, size = 0x2000, scoped, tag = 'output window, operand 1']
    #allocation3 [shape = 's32[2]{0}', space=sflag, size = 0x8, scoped, tag = 'scoped memory for tpu_custom_call.1']
    %17 = vsyncpa [#allocation3], 0
    %s18 = scalar_lea.sflag [#allocation3], 1
    %19 = vsyncpa %s18, 0
    loop: start=0, step=1, limit=4
    $region2: #{tpu_custom_call.1} parent=1 // loop_pre_header
      _
    $region3: #{tpu_custom_call.1} parent=1 // loop_header
      %s21 = sphi 0, %s25
      %p22 = scmp.ge.s32.totalorder %s21, 4
      %s31 = sphi 0, %s33
      %s34 = sphi 0, %s31
      %s35 = sphi 0, %s34
      %s51 = sphi 0, %s35
      %s57 = sphi 0, %s59
      %s60 = sphi 0, %s57
      %s61 = sphi 0, %s60
      %s77 = sphi 0, %s61
      %s81 = sphi 0, %s81
      %s83 = sphi 0, %s81
      %s84 = sphi 0, %s83
      %s98 = sphi 0, %s84
      %s102 = sphi 0, %s102
      %s104 = sphi 0, %s102
      %s105 = sphi 0, %s104
      %s119 = sphi 0, %s105
      %s123 = sphi 0, %s123
      %s125 = sphi 0, %s123
      %s126 = sphi 0, %s125
      %s140 = sphi 0, %s126
      %s144 = sphi 0, %s144
      %s146 = sphi 0, %s144
      %s147 = sphi 0, %s146
      %s161 = sphi 0, %s147
      %s165 = sphi 0, %s165
      %s167 = sphi 0, %s165
      %s168 = sphi 0, %s167
      %s182 = sphi 0, %s168
      %s186 = sphi 0, %s186
      %s188 = sphi 0, %s186
      %s189 = sphi 0, %s188
      %s203 = sphi 0, %s189
      %s207 = sphi 0, %s207
      %s209 = sphi 0, %s207
      %s210 = sphi 0, %s209
      %s224 = sphi 0, %s210
      %s228 = sphi 0, %s228
      %s230 = sphi 0, %s228
      %s231 = sphi 0, %s230
      %s245 = sphi 0, %s231
      %s251 = sphi 0, %s253
      %s254 = sphi 0, %s251
      %s255 = sphi 0, %s254
      %s271 = sphi 0, %s255
      %s277 = sphi 0, %s279
      %s280 = sphi 0, %s277
      %s281 = sphi 0, %s280
      %s297 = sphi 0, %s281
    $region4: #{tpu_custom_call.1} parent=1 // loop_header_branch
      %24 = sbr.rel (%p22) target = $region8
    $region5: #{tpu_custom_call.1} parent=1 // loop_body
      %s26 = ssub.s32 %s21, 1
      %s27 = ssub.s32 %s21, 2
      %s28 = sadd.s32 %s21, 1
      %s29 = ssub.s32 %s21, %s28
      %p30 = scmp.eq.s32.totalorder %s29, 0
      %s32 = sadd.s32 %s31, 1
      %s33 = scalar_select %p30, %s31, %s32
      %p36 = pneg %p30
      %p37 = scmp.eq.s32.totalorder %s21, 1
      %p38 = por %p36, %p37
      %p39 = scmp.ne.s32.totalorder %s31, %s34
      %p40 = scmp.eq.s32.totalorder %s21, 0
      %p41 = por %p39, %p40
      %p42 = scmp.ne.s32.totalorder %s31, %s34
      %p43 = scmp.eq.s32.totalorder %s26, 1
      %p44 = por %p42, %p43
      %p45 = scmp.ne.s32.totalorder %s34, %s35
      %p46 = scmp.eq.s32.totalorder %s26, 0
      %p47 = por %p45, %p46
      %p48 = scmp.ne.s32.totalorder %s34, %s35
      %p49 = scmp.eq.s32.totalorder %s27, 1
      %p50 = por %p48, %p49
      %p52 = scmp.ne.s32.totalorder %s35, %s51
      %p53 = scmp.eq.s32.totalorder %s27, 0
      %p54 = por %p52, %p53
      %s55 = ssub.s32 %s21, %s28
      %p56 = scmp.eq.s32.totalorder %s55, 0
      %s58 = sadd.s32 %s57, 1
      %s59 = scalar_select %p56, %s57, %s58
      %p62 = pneg %p56
      %p63 = scmp.eq.s32.totalorder %s21, 1
      %p64 = por %p62, %p63
      %p65 = scmp.ne.s32.totalorder %s57, %s60
      %p66 = scmp.eq.s32.totalorder %s21, 0
      %p67 = por %p65, %p66
      %p68 = scmp.ne.s32.totalorder %s57, %s60
      %p69 = scmp.eq.s32.totalorder %s26, 1
      %p70 = por %p68, %p69
      %p71 = scmp.ne.s32.totalorder %s60, %s61
      %p72 = scmp.eq.s32.totalorder %s26, 0
      %p73 = por %p71, %p72
      %p74 = scmp.ne.s32.totalorder %s60, %s61
      %p75 = scmp.eq.s32.totalorder %s27, 1
      %p76 = por %p74, %p75
      %p78 = scmp.ne.s32.totalorder %s61, %s77
      %p79 = scmp.eq.s32.totalorder %s27, 0
      %p80 = por %p78, %p79
      %s82 = sadd.s32 %s81, 1
      %p85 = scmp.eq.s32.totalorder %s21, 1
      %p86 = scmp.ne.s32.totalorder %s81, %s83
      %p87 = scmp.eq.s32.totalorder %s21, 0
      %p88 = por %p86, %p87
      %p89 = scmp.ne.s32.totalorder %s81, %s83
      %p90 = scmp.eq.s32.totalorder %s26, 1
      %p91 = por %p89, %p90
      %p92 = scmp.ne.s32.totalorder %s83, %s84
      %p93 = scmp.eq.s32.totalorder %s26, 0
      %p94 = por %p92, %p93
      %p95 = scmp.ne.s32.totalorder %s83, %s84
      %p96 = scmp.eq.s32.totalorder %s27, 1
      %p97 = por %p95, %p96
      %p99 = scmp.ne.s32.totalorder %s84, %s98
      %p100 = scmp.eq.s32.totalorder %s27, 0
      %p101 = por %p99, %p100
      %s103 = sadd.s32 %s102, 1
      %p106 = scmp.eq.s32.totalorder %s21, 1
      %p107 = scmp.ne.s32.totalorder %s102, %s104
      %p108 = scmp.eq.s32.totalorder %s21, 0
      %p109 = por %p107, %p108
      %p110 = scmp.ne.s32.totalorder %s102, %s104
      %p111 = scmp.eq.s32.totalorder %s26, 1
      %p112 = por %p110, %p111
      %p113 = scmp.ne.s32.totalorder %s104, %s105
      %p114 = scmp.eq.s32.totalorder %s26, 0
      %p115 = por %p113, %p114
      %p116 = scmp.ne.s32.totalorder %s104, %s105
      %p117 = scmp.eq.s32.totalorder %s27, 1
      %p118 = por %p116, %p117
      %p120 = scmp.ne.s32.totalorder %s105, %s119
      %p121 = scmp.eq.s32.totalorder %s27, 0
      %p122 = por %p120, %p121
      %s124 = sadd.s32 %s123, 1
      %p127 = scmp.eq.s32.totalorder %s21, 1
      %p128 = scmp.ne.s32.totalorder %s123, %s125
      %p129 = scmp.eq.s32.totalorder %s21, 0
      %p130 = por %p128, %p129
      %p131 = scmp.ne.s32.totalorder %s123, %s125
      %p132 = scmp.eq.s32.totalorder %s26, 1
      %p133 = por %p131, %p132
      %p134 = scmp.ne.s32.totalorder %s125, %s126
      %p135 = scmp.eq.s32.totalorder %s26, 0
      %p136 = por %p134, %p135
      %p137 = scmp.ne.s32.totalorder %s125, %s126
      %p138 = scmp.eq.s32.totalorder %s27, 1
      %p139 = por %p137, %p138
      %p141 = scmp.ne.s32.totalorder %s126, %s140
      %p142 = scmp.eq.s32.totalorder %s27, 0
      %p143 = por %p141, %p142
      %s145 = sadd.s32 %s144, 1
      %p148 = scmp.eq.s32.totalorder %s21, 1
      %p149 = scmp.ne.s32.totalorder %s144, %s146
      %p150 = scmp.eq.s32.totalorder %s21, 0
      %p151 = por %p149, %p150
      %p152 = scmp.ne.s32.totalorder %s144, %s146
      %p153 = scmp.eq.s32.totalorder %s26, 1
      %p154 = por %p152, %p153
      %p155 = scmp.ne.s32.totalorder %s146, %s147
      %p156 = scmp.eq.s32.totalorder %s26, 0
      %p157 = por %p155, %p156
      %p158 = scmp.ne.s32.totalorder %s146, %s147
      %p159 = scmp.eq.s32.totalorder %s27, 1
      %p160 = por %p158, %p159
      %p162 = scmp.ne.s32.totalorder %s147, %s161
      %p163 = scmp.eq.s32.totalorder %s27, 0
      %p164 = por %p162, %p163
      %s166 = sadd.s32 %s165, 1
      %p169 = scmp.eq.s32.totalorder %s21, 1
      %p170 = scmp.ne.s32.totalorder %s165, %s167
      %p171 = scmp.eq.s32.totalorder %s21, 0
      %p172 = por %p170, %p171
      %p173 = scmp.ne.s32.totalorder %s165, %s167
      %p174 = scmp.eq.s32.totalorder %s26, 1
      %p175 = por %p173, %p174
      %p176 = scmp.ne.s32.totalorder %s167, %s168
      %p177 = scmp.eq.s32.totalorder %s26, 0
      %p178 = por %p176, %p177
      %p179 = scmp.ne.s32.totalorder %s167, %s168
      %p180 = scmp.eq.s32.totalorder %s27, 1
      %p181 = por %p179, %p180
      %p183 = scmp.ne.s32.totalorder %s168, %s182
      %p184 = scmp.eq.s32.totalorder %s27, 0
      %p185 = por %p183, %p184
      %s187 = sadd.s32 %s186, 1
      %p190 = scmp.eq.s32.totalorder %s21, 1
      %p191 = scmp.ne.s32.totalorder %s186, %s188
      %p192 = scmp.eq.s32.totalorder %s21, 0
      %p193 = por %p191, %p192
      %p194 = scmp.ne.s32.totalorder %s186, %s188
      %p195 = scmp.eq.s32.totalorder %s26, 1
      %p196 = por %p194, %p195
      %p197 = scmp.ne.s32.totalorder %s188, %s189
      %p198 = scmp.eq.s32.totalorder %s26, 0
      %p199 = por %p197, %p198
      %p200 = scmp.ne.s32.totalorder %s188, %s189
      %p201 = scmp.eq.s32.totalorder %s27, 1
      %p202 = por %p200, %p201
      %p204 = scmp.ne.s32.totalorder %s189, %s203
      %p205 = scmp.eq.s32.totalorder %s27, 0
      %p206 = por %p204, %p205
      %s208 = sadd.s32 %s207, 1
      %p211 = scmp.eq.s32.totalorder %s21, 1
      %p212 = scmp.ne.s32.totalorder %s207, %s209
      %p213 = scmp.eq.s32.totalorder %s21, 0
      %p214 = por %p212, %p213
      %p215 = scmp.ne.s32.totalorder %s207, %s209
      %p216 = scmp.eq.s32.totalorder %s26, 1
      %p217 = por %p215, %p216
      %p218 = scmp.ne.s32.totalorder %s209, %s210
      %p219 = scmp.eq.s32.totalorder %s26, 0
      %p220 = por %p218, %p219
      %p221 = scmp.ne.s32.totalorder %s209, %s210
      %p222 = scmp.eq.s32.totalorder %s27, 1
      %p223 = por %p221, %p222
      %p225 = scmp.ne.s32.totalorder %s210, %s224
      %p226 = scmp.eq.s32.totalorder %s27, 0
      %p227 = por %p225, %p226
      %s229 = sadd.s32 %s228, 1
      %p232 = scmp.eq.s32.totalorder %s21, 1
      %p233 = scmp.ne.s32.totalorder %s228, %s230
      %p234 = scmp.eq.s32.totalorder %s21, 0
      %p235 = por %p233, %p234
      %p236 = scmp.ne.s32.totalorder %s228, %s230
      %p237 = scmp.eq.s32.totalorder %s26, 1
      %p238 = por %p236, %p237
      %p239 = scmp.ne.s32.totalorder %s230, %s231
      %p240 = scmp.eq.s32.totalorder %s26, 0
      %p241 = por %p239, %p240
      %p242 = scmp.ne.s32.totalorder %s230, %s231
      %p243 = scmp.eq.s32.totalorder %s27, 1
      %p244 = por %p242, %p243
      %p246 = scmp.ne.s32.totalorder %s231, %s245
      %p247 = scmp.eq.s32.totalorder %s27, 0
      %p248 = por %p246, %p247
      %s249 = ssub.s32 %s21, %s28
      %p250 = scmp.eq.s32.totalorder %s249, 0
      %s252 = sadd.s32 %s251, 1
      %s253 = scalar_select %p250, %s251, %s252
      %p256 = pneg %p250
      %p257 = scmp.eq.s32.totalorder %s21, 1
      %p258 = por %p256, %p257
      %p259 = scmp.ne.s32.totalorder %s251, %s254
      %p260 = scmp.eq.s32.totalorder %s21, 0
      %p261 = por %p259, %p260
      %p262 = scmp.ne.s32.totalorder %s251, %s254
      %p263 = scmp.eq.s32.totalorder %s26, 1
      %p264 = por %p262, %p263
      %p265 = scmp.ne.s32.totalorder %s254, %s255
      %p266 = scmp.eq.s32.totalorder %s26, 0
      %p267 = por %p265, %p266
      %p268 = scmp.ne.s32.totalorder %s254, %s255
      %p269 = scmp.eq.s32.totalorder %s27, 1
      %p270 = por %p268, %p269
      %p272 = scmp.ne.s32.totalorder %s255, %s271
      %p273 = scmp.eq.s32.totalorder %s27, 0
      %p274 = por %p272, %p273
      %s275 = ssub.s32 %s21, %s28
      %p276 = scmp.eq.s32.totalorder %s275, 0
      %s278 = sadd.s32 %s277, 1
      %s279 = scalar_select %p276, %s277, %s278
      %p282 = pneg %p276
      %p283 = scmp.eq.s32.totalorder %s21, 1
      %p284 = por %p282, %p283
      %p285 = scmp.ne.s32.totalorder %s277, %s280
      %p286 = scmp.eq.s32.totalorder %s21, 0
      %p287 = por %p285, %p286
      %p288 = scmp.ne.s32.totalorder %s277, %s280
      %p289 = scmp.eq.s32.totalorder %s26, 1
      %p290 = por %p288, %p289
      %p291 = scmp.ne.s32.totalorder %s280, %s281
      %p292 = scmp.eq.s32.totalorder %s26, 0
      %p293 = por %p291, %p292
      %p294 = scmp.ne.s32.totalorder %s280, %s281
      %p295 = scmp.eq.s32.totalorder %s27, 1
      %p296 = por %p294, %p295
      %p298 = scmp.ne.s32.totalorder %s281, %s297
      %p299 = scmp.eq.s32.totalorder %s27, 0
      %p300 = por %p298, %p299
      %p301 = scmp.le.s32.totalorder 1, %s21
      %p302 = scmp.lt.s32.totalorder %s21, 3
      %p303 = pnand %p301, %p302
      %p304 = pneg %p303
      // Predicated region
      $region9: #{tpu_custom_call.1} parent=5 // pred_check
        _
      $region10: #{tpu_custom_call.1} parent=5 // pred_check_branch
        %306 = sbr.rel (%p303) target = $region12
      $region11: #{tpu_custom_call.1} parent=5 // pred_region
        %s307 = ssub.s32 %s21, 1
        // Predicated region
        $region13: #{tpu_custom_call.1} parent=11 // pred_check
          %p308 = pneg %p94
        $region14: #{tpu_custom_call.1} parent=11 // pred_check_branch
          %310 = sbr.rel (%p308) target = $region16
        $region15: #{tpu_custom_call.1} parent=11 // pred_region
          _
        $region16: #{tpu_custom_call.1} parent=11 // pred_fallthru
          _
        // Predicated region
        $region17: #{tpu_custom_call.1} parent=11 // pred_check
          %p311 = pneg %p115
        $region18: #{tpu_custom_call.1} parent=11 // pred_check_branch
          %313 = sbr.rel (%p311) target = $region20
        $region19: #{tpu_custom_call.1} parent=11 // pred_region
          _
        $region20: #{tpu_custom_call.1} parent=11 // pred_fallthru
          _
        // Predicated region
        $region21: #{tpu_custom_call.1} parent=11 // pred_check
          %p314 = pneg %p136
        $region22: #{tpu_custom_call.1} parent=11 // pred_check_branch
          %316 = sbr.rel (%p314) target = $region24
        $region23: #{tpu_custom_call.1} parent=11 // pred_region
          _
        $region24: #{tpu_custom_call.1} parent=11 // pred_fallthru
          _
        // Predicated region
        $region25: #{tpu_custom_call.1} parent=11 // pred_check
          %p317 = pneg %p157
        $region26: #{tpu_custom_call.1} parent=11 // pred_check_branch
          %319 = sbr.rel (%p317) target = $region28
        $region27: #{tpu_custom_call.1} parent=11 // pred_region
          _
        $region28: #{tpu_custom_call.1} parent=11 // pred_fallthru
          _
        // Predicated region
        $region29: #{tpu_custom_call.1} parent=11 // pred_check
          %p320 = pneg %p178
        $region30: #{tpu_custom_call.1} parent=11 // pred_check_branch
          %322 = sbr.rel (%p320) target = $region32
        $region31: #{tpu_custom_call.1} parent=11 // pred_region
          _
        $region32: #{tpu_custom_call.1} parent=11 // pred_fallthru
          _
        // Predicated region
        $region33: #{tpu_custom_call.1} parent=11 // pred_check
          %p323 = pneg %p199
        $region34: #{tpu_custom_call.1} parent=11 // pred_check_branch
          %325 = sbr.rel (%p323) target = $region36
        $region35: #{tpu_custom_call.1} parent=11 // pred_region
          _
        $region36: #{tpu_custom_call.1} parent=11 // pred_fallthru
          _
        // Predicated region
        $region37: #{tpu_custom_call.1} parent=11 // pred_check
          %p326 = pneg %p220
        $region38: #{tpu_custom_call.1} parent=11 // pred_check_branch
          %328 = sbr.rel (%p326) target = $region40
        $region39: #{tpu_custom_call.1} parent=11 // pred_region
          _
        $region40: #{tpu_custom_call.1} parent=11 // pred_fallthru
          _
        // Predicated region
        $region41: #{tpu_custom_call.1} parent=11 // pred_check
          %p329 = pneg %p241
        $region42: #{tpu_custom_call.1} parent=11 // pred_check_branch
          %331 = sbr.rel (%p329) target = $region44
        $region43: #{tpu_custom_call.1} parent=11 // pred_region
          _
        $region44: #{tpu_custom_call.1} parent=11 // pred_fallthru
          _
      $region12: #{tpu_custom_call.1} parent=5 // pred_fallthru
        _
      %p332 = scmp.lt.s32.totalorder %s21, 2
      // Predicated region
      $region45: #{tpu_custom_call.1} parent=5 // pred_check
        %p333 = pneg %p332
      $region46: #{tpu_custom_call.1} parent=5 // pred_check_branch
        %335 = sbr.rel (%p333) target = $region48
      $region47: #{tpu_custom_call.1} parent=5 // pred_region
        // Predicated region
        $region49: #{tpu_custom_call.1} parent=47 // pred_check
          %p336 = pneg %p41
        $region50: #{tpu_custom_call.1} parent=47 // pred_check_branch
          %338 = sbr.rel (%p336) target = $region52
        $region51: #{tpu_custom_call.1} parent=47 // pred_region
          %s339 = smul.u32 8, %s21
          %p340 = scmp.lt.s32.totalorder %s339, 15
          %s341 = scalar_select %p340, %s339, 15
          %s342 = smul.addr %s341, 2
          %s343 = smul.addr %s342, 8
          %s344 = scalar_lea.vmem %s0, %s343
          %s345 = smul.u32 8, %s21
        $region52: #{tpu_custom_call.1} parent=47 // pred_fallthru
          _
        // Predicated region
        $region53: #{tpu_custom_call.1} parent=47 // pred_check
          %p346 = pneg %p67
        $region54: #{tpu_custom_call.1} parent=47 // pred_check_branch
          %348 = sbr.rel (%p346) target = $region56
        $region55: #{tpu_custom_call.1} parent=47 // pred_region
          %s349 = smul.u32 8, %s21
          %p350 = scmp.lt.s32.totalorder %s349, 15
          %s351 = scalar_select %p350, %s349, 15
          %s352 = smul.addr %s351, 2
          %s353 = smul.addr %s352, 8
          %s354 = scalar_lea.vmem %s1, %s353
          %s355 = smul.u32 8, %s21
        $region56: #{tpu_custom_call.1} parent=47 // pred_fallthru
          _
      $region48: #{tpu_custom_call.1} parent=5 // pred_fallthru
        _
      %p356 = scmp.le.s32.totalorder 1, %s21
      %p357 = scmp.lt.s32.totalorder %s21, 3
      %p358 = pnand %p356, %p357
      %p359 = pneg %p358
      // Predicated region
      $region57: #{tpu_custom_call.1} parent=5 // pred_check
        _
      $region58: #{tpu_custom_call.1} parent=5 // pred_check_branch
        %361 = sbr.rel (%p358) target = $region60
      $region59: #{tpu_custom_call.1} parent=5 // pred_region
        %s362 = ssub.s32 %s21, 1
        %s363 = smul.u32 8, %s26
        %p364 = scmp.lt.s32.totalorder %s363, 15
        %s365 = scalar_select %p364, %s363, 15
        %s366 = smul.addr %s365, 2
        %s367 = smul.addr %s366, 8
        %s368 = scalar_lea.vmem %s0, %s367
        %p369 = pneg %p47
        %p370 = pneg %p44
        %s371 = smul.u32 8, %s26
        %p372 = scmp.lt.s32.totalorder %s371, 15
        %s373 = scalar_select %p372, %s371, 15
        %s374 = smul.addr %s373, 2
        %s375 = smul.addr %s374, 8
        %s376 = scalar_lea.vmem %s1, %s375
        %p377 = pneg %p73
        %p378 = pneg %p70
        %p379 = pneg %p94
        %p380 = pneg %p91
        %p381 = pneg %p115
        %p382 = pneg %p112
        %p383 = pneg %p136
        %p384 = pneg %p133
        %p385 = pneg %p157
        %p386 = pneg %p154
        %p387 = pneg %p178
        %p388 = pneg %p175
        %p389 = pneg %p199
        %p390 = pneg %p196
        %p391 = pneg %p220
        %p392 = pneg %p217
        %p393 = pneg %p241
        %p394 = pneg %p238
        %p395 = pneg %p267
        %p396 = pneg %p264
        %p397 = scmp.lt.s32.totalorder %s26, 1
        %s398 = scalar_select %p397, %s26, 1
        %s399 = smul.addr %s398, 8
        %s400 = scalar_lea.vmem %s10, %s399
        %p401 = pneg %p293
        %p402 = pneg %p290
        %s403 = sand.u32 %s280, 1
        %s404 = scalar_lea.sflag [#allocation3], %s403
        %s405 = sand.u32 %s280, 1
        %s406 = smul.addr %s405, 8
        %s407 = scalar_lea.vmem [#allocation2], %s406
        %s408 = smul.u32 8, %s26
        %p409 = scmp.lt.s32.totalorder %s408, 15
        %s410 = scalar_select %p409, %s408, 15
        %s411 = smul.addr %s410, 2
        %s412 = smul.addr %s411, 8
        %s413 = scalar_lea.vmem %s0, %s412
        %s414 = smul.u32 8, %s26
        %s415 = smul.u32 8, %s26
        %p416 = scmp.lt.s32.totalorder %s415, 15
        %s417 = scalar_select %p416, %s415, 15
        %s418 = smul.addr %s417, 2
        %s419 = smul.addr %s418, 8
        %s420 = scalar_lea.vmem %s1, %s419
        %s421 = smul.u32 8, %s26
        %p422 = scmp.lt.s32.totalorder %s26, 1
        %s423 = scalar_select %p422, %s26, 1
        %s424 = smul.addr %s423, 8
        %s425 = scalar_lea.vmem %s10, %s424
        %v427 = vld [vmem:[%s413] sm:$0xff]
        %v428 = vld [vmem:[%s413 + $0x8] sm:$0xff]
        %v429 = vld [vmem:[%s413 + $0x10] sm:$0xff]
        %v430 = vld [vmem:[%s413 + $0x18] sm:$0xff]
        %v431 = vld [vmem:[%s413 + $0x20] sm:$0xff]
        %v432 = vld [vmem:[%s413 + $0x28] sm:$0xff]
        %v433 = vld [vmem:[%s413 + $0x30] sm:$0xff]
        %v434 = vld [vmem:[%s413 + $0x38] sm:$0xff]
        %v435 = vld [vmem:[%s413 + $0x40] sm:$0xff]
        %v436 = vld [vmem:[%s413 + $0x48] sm:$0xff]
        %v437 = vld [vmem:[%s413 + $0x50] sm:$0xff]
        %v438 = vld [vmem:[%s413 + $0x58] sm:$0xff]
        %v439 = vld [vmem:[%s413 + $0x60] sm:$0xff]
        %v440 = vld [vmem:[%s413 + $0x68] sm:$0xff]
        %v441 = vld [vmem:[%s413 + $0x70] sm:$0xff]
        %v442 = vld [vmem:[%s413 + $0x78] sm:$0xff]
        %vm459 = vcmask 1040384
        %v460 = vrot.slane %v427, 7
        %v461 = vrot.slane %v428, 7
        %v462 = vsel %vm459, %v460, %v461
        %v463 = vrot.slane %v429, 7
        %v464 = vrot.slane %v430, 7
        %v465 = vsel %vm459, %v463, %v464
        %v466 = vrot.slane %v431, 7
        %v467 = vrot.slane %v432, 7
        %v468 = vsel %vm459, %v466, %v467
        %v469 = vrot.slane %v433, 7
        %v470 = vrot.slane %v434, 7
        %v471 = vsel %vm459, %v469, %v470
        %v472 = vrot.slane %v435, 7
        %v473 = vrot.slane %v436, 7
        %v474 = vsel %vm459, %v472, %v473
        %v475 = vrot.slane %v437, 7
        %v476 = vrot.slane %v438, 7
        %v477 = vsel %vm459, %v475, %v476
        %v478 = vrot.slane %v439, 7
        %v479 = vrot.slane %v440, 7
        %v480 = vsel %vm459, %v478, %v479
        %v481 = vrot.slane %v441, 7
        %v482 = vrot.slane %v442, 7
        %v483 = vsel %vm459, %v481, %v482
        %v508 = vsel %vm459, 0.0, %v460
        %v509 = vsel %vm459, 0.0, %v463
        %v510 = vsel %vm459, 0.0, %v466
        %v511 = vsel %vm459, 0.0, %v469
        %v512 = vsel %vm459, 0.0, %v472
        %v513 = vsel %vm459, 0.0, %v475
        %v514 = vsel %vm459, 0.0, %v478
        %v515 = vsel %vm459, 0.0, %v481
        %v516 = vsel %vm459, %v461, 0.0
        %v517 = vsel %vm459, %v464, 0.0
        %v518 = vsel %vm459, %v467, 0.0
        %v519 = vsel %vm459, %v470, 0.0
        %v520 = vsel %vm459, %v473, 0.0
        %v521 = vsel %vm459, %v476, 0.0
        %v522 = vsel %vm459, %v479, 0.0
        %v523 = vsel %vm459, %v482, 0.0
        %vm540 = vcmask 1046528
        %v541 = vrot.slane %v508, 1
        %v542 = vrot.slane %v462, 1
        %v543 = vsel %vm540, %v541, %v542
        %v544 = vrot.slane %v516, 1
        %v545 = vsel %vm540, %v542, %v544
        %v546 = vrot.slane %v509, 1
        %v547 = vrot.slane %v465, 1
        %v548 = vsel %vm540, %v546, %v547
        %v549 = vrot.slane %v517, 1
        %v550 = vsel %vm540, %v547, %v549
        %v551 = vrot.slane %v510, 1
        %v552 = vrot.slane %v468, 1
        %v553 = vsel %vm540, %v551, %v552
        %v554 = vrot.slane %v518, 1
        %v555 = vsel %vm540, %v552, %v554
        %v556 = vrot.slane %v511, 1
        %v557 = vrot.slane %v471, 1
        %v558 = vsel %vm540, %v556, %v557
        %v559 = vrot.slane %v519, 1
        %v560 = vsel %vm540, %v557, %v559
        %v561 = vrot.slane %v512, 1
        %v562 = vrot.slane %v474, 1
        %v563 = vsel %vm540, %v561, %v562
        %v564 = vrot.slane %v520, 1
        %v565 = vsel %vm540, %v562, %v564
        %v566 = vrot.slane %v513, 1
        %v567 = vrot.slane %v477, 1
        %v568 = vsel %vm540, %v566, %v567
        %v569 = vrot.slane %v521, 1
        %v570 = vsel %vm540, %v567, %v569
        %v571 = vrot.slane %v514, 1
        %v572 = vrot.slane %v480, 1
        %v573 = vsel %vm540, %v571, %v572
        %v574 = vrot.slane %v522, 1
        %v575 = vsel %vm540, %v572, %v574
        %v576 = vrot.slane %v515, 1
        %v577 = vrot.slane %v483, 1
        %v578 = vsel %vm540, %v576, %v577
        %v579 = vrot.slane %v523, 1
        %v580 = vsel %vm540, %v577, %v579
        %581 = vrot.lane.b32.xlu0 %v543, 4
        %v582 = vpop.permute.xlu0 %581
        %583 = vrot.lane.b32.xlu0 %v545, 4
        %v584 = vpop.permute.xlu0 %583
        %585 = vrot.lane.b32.xlu0 %v548, 4
        %v586 = vpop.permute.xlu0 %585
        %587 = vrot.lane.b32.xlu0 %v550, 4
        %v588 = vpop.permute.xlu0 %587
        %589 = vrot.lane.b32.xlu0 %v553, 4
        %v590 = vpop.permute.xlu0 %589
        %591 = vrot.lane.b32.xlu0 %v555, 4
        %v592 = vpop.permute.xlu0 %591
        %593 = vrot.lane.b32.xlu0 %v558, 4
        %v594 = vpop.permute.xlu0 %593
        %595 = vrot.lane.b32.xlu0 %v560, 4
        %v596 = vpop.permute.xlu0 %595
        %597 = vrot.lane.b32.xlu0 %v563, 4
        %v598 = vpop.permute.xlu0 %597
        %599 = vrot.lane.b32.xlu0 %v565, 4
        %v600 = vpop.permute.xlu0 %599
        %601 = vrot.lane.b32.xlu0 %v568, 4
        %v602 = vpop.permute.xlu0 %601
        %603 = vrot.lane.b32.xlu0 %v570, 4
        %v604 = vpop.permute.xlu0 %603
        %605 = vrot.lane.b32.xlu0 %v573, 4
        %v606 = vpop.permute.xlu0 %605
        %607 = vrot.lane.b32.xlu0 %v575, 4
        %v608 = vpop.permute.xlu0 %607
        %609 = vrot.lane.b32.xlu0 %v578, 4
        %v610 = vpop.permute.xlu0 %609
        %611 = vrot.lane.b32.xlu0 %v580, 4
        %v612 = vpop.permute.xlu0 %611
        %vm629 = vcmask 1045504
        %v630 = vrot.slane %v508, 2
        %v631 = vrot.slane %v462, 2
        %v632 = vsel %vm629, %v630, %v631
        %v633 = vrot.slane %v516, 2
        %v634 = vsel %vm629, %v631, %v633
        %v635 = vrot.slane %v509, 2
        %v636 = vrot.slane %v465, 2
        %v637 = vsel %vm629, %v635, %v636
        %v638 = vrot.slane %v517, 2
        %v639 = vsel %vm629, %v636, %v638
        %v640 = vrot.slane %v510, 2
        %v641 = vrot.slane %v468, 2
        %v642 = vsel %vm629, %v640, %v641
        %v643 = vrot.slane %v518, 2
        %v644 = vsel %vm629, %v641, %v643
        %v645 = vrot.slane %v511, 2
        %v646 = vrot.slane %v471, 2
        %v647 = vsel %vm629, %v645, %v646
        %v648 = vrot.slane %v519, 2
        %v649 = vsel %vm629, %v646, %v648
        %v650 = vrot.slane %v512, 2
        %v651 = vrot.slane %v474, 2
        %v652 = vsel %vm629, %v650, %v651
        %v653 = vrot.slane %v520, 2
        %v654 = vsel %vm629, %v651, %v653
        %v655 = vrot.slane %v513, 2
        %v656 = vrot.slane %v477, 2
        %v657 = vsel %vm629, %v655, %v656
        %v658 = vrot.slane %v521, 2
        %v659 = vsel %vm629, %v656, %v658
        %v660 = vrot.slane %v514, 2
        %v661 = vrot.slane %v480, 2
        %v662 = vsel %vm629, %v660, %v661
        %v663 = vrot.slane %v522, 2
        %v664 = vsel %vm629, %v661, %v663
        %v665 = vrot.slane %v515, 2
        %v666 = vrot.slane %v483, 2
        %v667 = vsel %vm629, %v665, %v666
        %v668 = vrot.slane %v523, 2
        %v669 = vsel %vm629, %v666, %v668
        %670 = vrot.lane.b32.xlu0 %v632, 8
        %v671 = vpop.permute.xlu0 %670
        %672 = vrot.lane.b32.xlu0 %v634, 8
        %v673 = vpop.permute.xlu0 %672
        %674 = vrot.lane.b32.xlu0 %v637, 8
        %v675 = vpop.permute.xlu0 %674
        %676 = vrot.lane.b32.xlu0 %v639, 8
        %v677 = vpop.permute.xlu0 %676
        %678 = vrot.lane.b32.xlu0 %v642, 8
        %v679 = vpop.permute.xlu0 %678
        %680 = vrot.lane.b32.xlu0 %v644, 8
        %v681 = vpop.permute.xlu0 %680
        %682 = vrot.lane.b32.xlu0 %v647, 8
        %v683 = vpop.permute.xlu0 %682
        %684 = vrot.lane.b32.xlu0 %v649, 8
        %v685 = vpop.permute.xlu0 %684
        %686 = vrot.lane.b32.xlu0 %v652, 8
        %v687 = vpop.permute.xlu0 %686
        %688 = vrot.lane.b32.xlu0 %v654, 8
        %v689 = vpop.permute.xlu0 %688
        %690 = vrot.lane.b32.xlu0 %v657, 8
        %v691 = vpop.permute.xlu0 %690
        %692 = vrot.lane.b32.xlu0 %v659, 8
        %v693 = vpop.permute.xlu0 %692
        %694 = vrot.lane.b32.xlu0 %v662, 8
        %v695 = vpop.permute.xlu0 %694
        %696 = vrot.lane.b32.xlu0 %v664, 8
        %v697 = vpop.permute.xlu0 %696
        %698 = vrot.lane.b32.xlu0 %v667, 8
        %v699 = vpop.permute.xlu0 %698
        %700 = vrot.lane.b32.xlu0 %v669, 8
        %v701 = vpop.permute.xlu0 %700
        %vm718 = vcmask 31744
        %v719 = vsel %vm718, %v508, %v582
        %v720 = vsel %vm718, %v462, %v584
        %v721 = vsel %vm718, %v509, %v586
        %v722 = vsel %vm718, %v465, %v588
        %v723 = vsel %vm718, %v510, %v590
        %v724 = vsel %vm718, %v468, %v592
        %v725 = vsel %vm718, %v511, %v594
        %v726 = vsel %vm718, %v471, %v596
        %v727 = vsel %vm718, %v512, %v598
        %v728 = vsel %vm718, %v474, %v600
        %v729 = vsel %vm718, %v513, %v602
        %v730 = vsel %vm718, %v477, %v604
        %v731 = vsel %vm718, %v514, %v606
        %v732 = vsel %vm718, %v480, %v608
        %v733 = vsel %vm718, %v515, %v610
        %v734 = vsel %vm718, %v483, %v612
        %vm735 = vcmask 64512
        %v736 = vsel %vm735, %v719, %v671
        %v737 = vsel %vm735, %v720, %v673
        %v738 = vsel %vm735, %v721, %v675
        %v739 = vsel %vm735, %v722, %v677
        %v740 = vsel %vm735, %v723, %v679
        %v741 = vsel %vm735, %v724, %v681
        %v742 = vsel %vm735, %v725, %v683
        %v743 = vsel %vm735, %v726, %v685
        %v744 = vsel %vm735, %v727, %v687
        %v745 = vsel %vm735, %v728, %v689
        %v746 = vsel %vm735, %v729, %v691
        %v747 = vsel %vm735, %v730, %v693
        %v748 = vsel %vm735, %v731, %v695
        %v749 = vsel %vm735, %v732, %v697
        %v750 = vsel %vm735, %v733, %v699
        %v751 = vsel %vm735, %v734, %v701
        %v752 = vld [vmem:[%s2] sm:$0xff]
        %v753 = vld [vmem:[%s2 + $0x8] sm:$0xf]
        %v754 = vpack.c.bf16 %v737, %v736
        %v755 = vpack.c.bf16 %v739, %v738
        %v756 = vpack.c.bf16 %v741, %v740
        %v757 = vpack.c.bf16 %v743, %v742
        %v758 = vpack.c.bf16 %v745, %v744
        %v759 = vpack.c.bf16 %v747, %v746
        %v760 = vpack.c.bf16 %v749, %v748
        %v761 = vpack.c.bf16 %v751, %v750
        %v762 = vpack.c.bf16 %v753, %v752
        %v763 = vld [vmem:[%s3] sm:$0x1]
        %v765 = vperm.slane %v763, 0
        %vm767 = vcmask 97280
        %v769 = vsel %vm767, %v754, 0
        %v772 = vsel %vm767, %v755, 0
        %v775 = vsel %vm767, %v756, 0
        %v778 = vsel %vm767, %v757, 0
        %v781 = vsel %vm767, %v758, 0
        %v784 = vsel %vm767, %v759, 0
        %v787 = vsel %vm767, %v760, 0
        %v790 = vsel %vm767, %v761, 0
        %v793 = vsel %vm629, %v762, 0
        %795 = vmatpush.bf16.msra.mxu0 0
        %796 = vmatpush.bf16.msra.mxu0 0
        %797 = vmatpush.bf16.msra.mxu0 0
        %798 = vmatpush.bf16.msra.mxu0 0
        %799 = vmatpush.bf16.msra.mxu0 0
        %800 = vmatpush.bf16.msra.mxu0 0
        %801 = vmatpush.bf16.msra.mxu0 0
        %802 = vmatpush.bf16.msra.mxu0 %v793
        %803 = vmatmul.bf16.gmra.mxu0 %v769
        %v804 = vpop.f32.mrf.mxu0
        %v805 = vadd.f32 %v765, %v804
        %v806 = vpop.f32.mrf.mxu0
        %v807 = vadd.f32 %v765, %v806
        %808 = vmatmul.bf16.gmra.mxu0 %v772
        %v809 = vpop.f32.mrf.mxu0
        %v810 = vadd.f32 %v765, %v809
        %v811 = vpop.f32.mrf.mxu0
        %v812 = vadd.f32 %v765, %v811
        %813 = vmatmul.bf16.gmra.mxu0 %v775
        %v814 = vpop.f32.mrf.mxu0
        %v815 = vadd.f32 %v765, %v814
        %v816 = vpop.f32.mrf.mxu0
        %v817 = vadd.f32 %v765, %v816
        %818 = vmatmul.bf16.gmra.mxu0 %v778
        %v819 = vpop.f32.mrf.mxu0
        %v820 = vadd.f32 %v765, %v819
        %v821 = vpop.f32.mrf.mxu0
        %v822 = vadd.f32 %v765, %v821
        %823 = vmatmul.bf16.gmra.mxu0 %v781
        %v824 = vpop.f32.mrf.mxu0
        %v825 = vadd.f32 %v765, %v824
        %v826 = vpop.f32.mrf.mxu0
        %v827 = vadd.f32 %v765, %v826
        %828 = vmatmul.bf16.gmra.mxu0 %v784
        %v829 = vpop.f32.mrf.mxu0
        %v830 = vadd.f32 %v765, %v829
        %v831 = vpop.f32.mrf.mxu0
        %v832 = vadd.f32 %v765, %v831
        %833 = vmatmul.bf16.gmra.mxu0 %v787
        %v834 = vpop.f32.mrf.mxu0
        %v835 = vadd.f32 %v765, %v834
        %v836 = vpop.f32.mrf.mxu0
        %v837 = vadd.f32 %v765, %v836
        %838 = vmatmul.bf16.gmra.mxu0 %v790
        %v839 = vpop.f32.mrf.mxu0
        %v840 = vadd.f32 %v765, %v839
        %v841 = vpop.f32.mrf.mxu0
        %v842 = vadd.f32 %v765, %v841
        %843 = vdwg.mxu0
        %v844 = vmax.f32 %v805, 0.0
        %v845 = vmax.f32 %v807, 0.0
        %v846 = vmax.f32 %v810, 0.0
        %v847 = vmax.f32 %v812, 0.0
        %v848 = vmax.f32 %v815, 0.0
        %v849 = vmax.f32 %v817, 0.0
        %v850 = vmax.f32 %v820, 0.0
        %v851 = vmax.f32 %v822, 0.0
        %v852 = vmax.f32 %v825, 0.0
        %v853 = vmax.f32 %v827, 0.0
        %v854 = vmax.f32 %v830, 0.0
        %v855 = vmax.f32 %v832, 0.0
        %v856 = vmax.f32 %v835, 0.0
        %v857 = vmax.f32 %v837, 0.0
        %v858 = vmax.f32 %v840, 0.0
        %v859 = vmax.f32 %v842, 0.0
        %v876 = vrot.slane %v844, 7
        %v877 = vrot.slane %v845, 7
        %v878 = vsel %vm459, %v876, %v877
        %v879 = vrot.slane %v846, 7
        %v880 = vrot.slane %v847, 7
        %v881 = vsel %vm459, %v879, %v880
        %v882 = vrot.slane %v848, 7
        %v883 = vrot.slane %v849, 7
        %v884 = vsel %vm459, %v882, %v883
        %v885 = vrot.slane %v850, 7
        %v886 = vrot.slane %v851, 7
        %v887 = vsel %vm459, %v885, %v886
        %v888 = vrot.slane %v852, 7
        %v889 = vrot.slane %v853, 7
        %v890 = vsel %vm459, %v888, %v889
        %v891 = vrot.slane %v854, 7
        %v892 = vrot.slane %v855, 7
        %v893 = vsel %vm459, %v891, %v892
        %v894 = vrot.slane %v856, 7
        %v895 = vrot.slane %v857, 7
        %v896 = vsel %vm459, %v894, %v895
        %v897 = vrot.slane %v858, 7
        %v898 = vrot.slane %v859, 7
        %v899 = vsel %vm459, %v897, %v898
        %v924 = vsel %vm459, 0.0, %v876
        %v925 = vsel %vm459, 0.0, %v879
        %v926 = vsel %vm459, 0.0, %v882
        %v927 = vsel %vm459, 0.0, %v885
        %v928 = vsel %vm459, 0.0, %v888
        %v929 = vsel %vm459, 0.0, %v891
        %v930 = vsel %vm459, 0.0, %v894
        %v931 = vsel %vm459, 0.0, %v897
        %v932 = vsel %vm459, %v877, 0.0
        %v933 = vsel %vm459, %v880, 0.0
        %v934 = vsel %vm459, %v883, 0.0
        %v935 = vsel %vm459, %v886, 0.0
        %v936 = vsel %vm459, %v889, 0.0
        %v937 = vsel %vm459, %v892, 0.0
        %v938 = vsel %vm459, %v895, 0.0
        %v939 = vsel %vm459, %v898, 0.0
        %v956 = vrot.slane %v924, 1
        %v957 = vrot.slane %v878, 1
        %v958 = vsel %vm540, %v956, %v957
        %v959 = vrot.slane %v932, 1
        %v960 = vsel %vm540, %v957, %v959
        %v961 = vrot.slane %v925, 1
        %v962 = vrot.slane %v881, 1
        %v963 = vsel %vm540, %v961, %v962
        %v964 = vrot.slane %v933, 1
        %v965 = vsel %vm540, %v962, %v964
        %v966 = vrot.slane %v926, 1
        %v967 = vrot.slane %v884, 1
        %v968 = vsel %vm540, %v966, %v967
        %v969 = vrot.slane %v934, 1
        %v970 = vsel %vm540, %v967, %v969
        %v971 = vrot.slane %v927, 1
        %v972 = vrot.slane %v887, 1
        %v973 = vsel %vm540, %v971, %v972
        %v974 = vrot.slane %v935, 1
        %v975 = vsel %vm540, %v972, %v974
        %v976 = vrot.slane %v928, 1
        %v977 = vrot.slane %v890, 1
        %v978 = vsel %vm540, %v976, %v977
        %v979 = vrot.slane %v936, 1
        %v980 = vsel %vm540, %v977, %v979
        %v981 = vrot.slane %v929, 1
        %v982 = vrot.slane %v893, 1
        %v983 = vsel %vm540, %v981, %v982
        %v984 = vrot.slane %v937, 1
        %v985 = vsel %vm540, %v982, %v984
        %v986 = vrot.slane %v930, 1
        %v987 = vrot.slane %v896, 1
        %v988 = vsel %vm540, %v986, %v987
        %v989 = vrot.slane %v938, 1
        %v990 = vsel %vm540, %v987, %v989
        %v991 = vrot.slane %v931, 1
        %v992 = vrot.slane %v899, 1
        %v993 = vsel %vm540, %v991, %v992
        %v994 = vrot.slane %v939, 1
        %v995 = vsel %vm540, %v992, %v994
        %996 = vrot.lane.b32.xlu0 %v958, 32
        %v997 = vpop.permute.xlu0 %996
        %998 = vrot.lane.b32.xlu0 %v960, 32
        %v999 = vpop.permute.xlu0 %998
        %1000 = vrot.lane.b32.xlu0 %v963, 32
        %v1001 = vpop.permute.xlu0 %1000
        %1002 = vrot.lane.b32.xlu0 %v965, 32
        %v1003 = vpop.permute.xlu0 %1002
        %1004 = vrot.lane.b32.xlu0 %v968, 32
        %v1005 = vpop.permute.xlu0 %1004
        %1006 = vrot.lane.b32.xlu0 %v970, 32
        %v1007 = vpop.permute.xlu0 %1006
        %1008 = vrot.lane.b32.xlu0 %v973, 32
        %v1009 = vpop.permute.xlu0 %1008
        %1010 = vrot.lane.b32.xlu0 %v975, 32
        %v1011 = vpop.permute.xlu0 %1010
        %1012 = vrot.lane.b32.xlu0 %v978, 32
        %v1013 = vpop.permute.xlu0 %1012
        %1014 = vrot.lane.b32.xlu0 %v980, 32
        %v1015 = vpop.permute.xlu0 %1014
        %1016 = vrot.lane.b32.xlu0 %v983, 32
        %v1017 = vpop.permute.xlu0 %1016
        %1018 = vrot.lane.b32.xlu0 %v985, 32
        %v1019 = vpop.permute.xlu0 %1018
        %1020 = vrot.lane.b32.xlu0 %v988, 32
        %v1021 = vpop.permute.xlu0 %1020
        %1022 = vrot.lane.b32.xlu0 %v990, 32
        %v1023 = vpop.permute.xlu0 %1022
        %1024 = vrot.lane.b32.xlu0 %v993, 32
        %v1025 = vpop.permute.xlu0 %1024
        %1026 = vrot.lane.b32.xlu0 %v995, 32
        %v1027 = vpop.permute.xlu0 %1026
        %v1044 = vrot.slane %v924, 2
        %v1045 = vrot.slane %v878, 2
        %v1046 = vsel %vm629, %v1044, %v1045
        %v1047 = vrot.slane %v932, 2
        %v1048 = vsel %vm629, %v1045, %v1047
        %v1049 = vrot.slane %v925, 2
        %v1050 = vrot.slane %v881, 2
        %v1051 = vsel %vm629, %v1049, %v1050
        %v1052 = vrot.slane %v933, 2
        %v1053 = vsel %vm629, %v1050, %v1052
        %v1054 = vrot.slane %v926, 2
        %v1055 = vrot.slane %v884, 2
        %v1056 = vsel %vm629, %v1054, %v1055
        %v1057 = vrot.slane %v934, 2
        %v1058 = vsel %vm629, %v1055, %v1057
        %v1059 = vrot.slane %v927, 2
        %v1060 = vrot.slane %v887, 2
        %v1061 = vsel %vm629, %v1059, %v1060
        %v1062 = vrot.slane %v935, 2
        %v1063 = vsel %vm629, %v1060, %v1062
        %v1064 = vrot.slane %v928, 2
        %v1065 = vrot.slane %v890, 2
        %v1066 = vsel %vm629, %v1064, %v1065
        %v1067 = vrot.slane %v936, 2
        %v1068 = vsel %vm629, %v1065, %v1067
        %v1069 = vrot.slane %v929, 2
        %v1070 = vrot.slane %v893, 2
        %v1071 = vsel %vm629, %v1069, %v1070
        %v1072 = vrot.slane %v937, 2
        %v1073 = vsel %vm629, %v1070, %v1072
        %v1074 = vrot.slane %v930, 2
        %v1075 = vrot.slane %v896, 2
        %v1076 = vsel %vm629, %v1074, %v1075
        %v1077 = vrot.slane %v938, 2
        %v1078 = vsel %vm629, %v1075, %v1077
        %v1079 = vrot.slane %v931, 2
        %v1080 = vrot.slane %v899, 2
        %v1081 = vsel %vm629, %v1079, %v1080
        %v1082 = vrot.slane %v939, 2
        %v1083 = vsel %vm629, %v1080, %v1082
        %1084 = vrot.lane.b32.xlu0 %v1046, 64
        %v1085 = vpop.permute.xlu0 %1084
        %1086 = vrot.lane.b32.xlu0 %v1048, 64
        %v1087 = vpop.permute.xlu0 %1086
        %1088 = vrot.lane.b32.xlu0 %v1051, 64
        %v1089 = vpop.permute.xlu0 %1088
        %1090 = vrot.lane.b32.xlu0 %v1053, 64
        %v1091 = vpop.permute.xlu0 %1090
        %1092 = vrot.lane.b32.xlu0 %v1056, 64
        %v1093 = vpop.permute.xlu0 %1092
        %1094 = vrot.lane.b32.xlu0 %v1058, 64
        %v1095 = vpop.permute.xlu0 %1094
        %1096 = vrot.lane.b32.xlu0 %v1061, 64
        %v1097 = vpop.permute.xlu0 %1096
        %1098 = vrot.lane.b32.xlu0 %v1063, 64
        %v1099 = vpop.permute.xlu0 %1098
        %1100 = vrot.lane.b32.xlu0 %v1066, 64
        %v1101 = vpop.permute.xlu0 %1100
        %1102 = vrot.lane.b32.xlu0 %v1068, 64
        %v1103 = vpop.permute.xlu0 %1102
        %1104 = vrot.lane.b32.xlu0 %v1071, 64
        %v1105 = vpop.permute.xlu0 %1104
        %1106 = vrot.lane.b32.xlu0 %v1073, 64
        %v1107 = vpop.permute.xlu0 %1106
        %1108 = vrot.lane.b32.xlu0 %v1076, 64
        %v1109 = vpop.permute.xlu0 %1108
        %1110 = vrot.lane.b32.xlu0 %v1078, 64
        %v1111 = vpop.permute.xlu0 %1110
        %1112 = vrot.lane.b32.xlu0 %v1081, 64
        %v1113 = vpop.permute.xlu0 %1112
        %1114 = vrot.lane.b32.xlu0 %v1083, 64
        %v1115 = vpop.permute.xlu0 %1114
        %vm1132 = vcmask 261120
        %v1133 = vsel %vm1132, %v924, %v997
        %v1134 = vsel %vm1132, %v878, %v999
        %v1135 = vsel %vm1132, %v925, %v1001
        %v1136 = vsel %vm1132, %v881, %v1003
        %v1137 = vsel %vm1132, %v926, %v1005
        %v1138 = vsel %vm1132, %v884, %v1007
        %v1139 = vsel %vm1132, %v927, %v1009
        %v1140 = vsel %vm1132, %v887, %v1011
        %v1141 = vsel %vm1132, %v928, %v1013
        %v1142 = vsel %vm1132, %v890, %v1015
        %v1143 = vsel %vm1132, %v929, %v1017
        %v1144 = vsel %vm1132, %v893, %v1019
        %v1145 = vsel %vm1132, %v930, %v1021
        %v1146 = vsel %vm1132, %v896, %v1023
        %v1147 = vsel %vm1132, %v931, %v1025
        %v1148 = vsel %vm1132, %v899, %v1027
        %vm1149 = vcmask 523264
        %v1150 = vsel %vm1149, %v1133, %v1085
        %v1151 = vsel %vm1149, %v1134, %v1087
        %v1152 = vsel %vm1149, %v1135, %v1089
        %v1153 = vsel %vm1149, %v1136, %v1091
        %v1154 = vsel %vm1149, %v1137, %v1093
        %v1155 = vsel %vm1149, %v1138, %v1095
        %v1156 = vsel %vm1149, %v1139, %v1097
        %v1157 = vsel %vm1149, %v1140, %v1099
        %v1158 = vsel %vm1149, %v1141, %v1101
        %v1159 = vsel %vm1149, %v1142, %v1103
        %v1160 = vsel %vm1149, %v1143, %v1105
        %v1161 = vsel %vm1149, %v1144, %v1107
        %v1162 = vsel %vm1149, %v1145, %v1109
        %v1163 = vsel %vm1149, %v1146, %v1111
        %v1164 = vsel %vm1149, %v1147, %v1113
        %v1165 = vsel %vm1149, %v1148, %v1115
        %v1166 = vld [vmem:[%s4] sm:$0xff]
        %v1167 = vld [vmem:[%s4 + $0x8] sm:$0xff]
        %v1168 = vld [vmem:[%s4 + $0x10] sm:$0xff]
        %v1169 = vld [vmem:[%s4 + $0x18] sm:$0xff]
        %v1170 = vld [vmem:[%s4 + $0x20] sm:$0xff]
        %v1171 = vld [vmem:[%s4 + $0x28] sm:$0xff]
        %v1172 = vld [vmem:[%s4 + $0x30] sm:$0xff]
        %v1173 = vld [vmem:[%s4 + $0x38] sm:$0xff]
        %v1174 = vld [vmem:[%s4 + $0x40] sm:$0xff]
        %v1175 = vld [vmem:[%s4 + $0x48] sm:$0xff]
        %v1176 = vld [vmem:[%s4 + $0x50] sm:$0xff]
        %v1177 = vld [vmem:[%s4 + $0x58] sm:$0xff]
        %v1178 = vpack.c.bf16 %v1151, %v1150
        %v1179 = vpack.c.bf16 %v1153, %v1152
        %v1180 = vpack.c.bf16 %v1155, %v1154
        %v1181 = vpack.c.bf16 %v1157, %v1156
        %v1182 = vpack.c.bf16 %v1159, %v1158
        %v1183 = vpack.c.bf16 %v1161, %v1160
        %v1184 = vpack.c.bf16 %v1163, %v1162
        %v1185 = vpack.c.bf16 %v1165, %v1164
        %v1186 = vpack.c.bf16 %v1167, %v1166
        %v1187 = vpack.c.bf16 %v1169, %v1168
        %v1188 = vpack.c.bf16 %v1171, %v1170
        %v1189 = vpack.c.bf16 %v1173, %v1172
        %v1190 = vpack.c.bf16 %v1175, %v1174
        %v1191 = vpack.c.bf16 %v1177, %v1176
        %v1192 = vld [vmem:[%s5] sm:$0x1]
        %v1194 = vperm.slane %v1192, 0
        %vm1196 = vcmask 785408
        %v1198 = vsel %vm1196, %v1178, 0
        %v1201 = vsel %vm1196, %v1179, 0
        %v1204 = vsel %vm1196, %v1180, 0
        %v1207 = vsel %vm1196, %v1181, 0
        %v1210 = vsel %vm1196, %v1182, 0
        %v1213 = vsel %vm1196, %v1183, 0
        %v1216 = vsel %vm1196, %v1184, 0
        %v1219 = vsel %vm1196, %v1185, 0
        %1221 = vmatpush.bf16.msra.mxu0 0
        %1222 = vmatpush.bf16.msra.mxu0 0
        %1223 = vmatpush.bf16.msra.mxu0 %v1191
        %1224 = vmatpush.bf16.msra.mxu0 %v1190
        %1225 = vmatpush.bf16.msra.mxu0 %v1189
        %1226 = vmatpush.bf16.msra.mxu0 %v1188
        %1227 = vmatpush.bf16.msra.mxu0 %v1187
        %1228 = vmatpush.bf16.msra.mxu0 %v1186
        %1229 = vmatmul.bf16.gmra.mxu0 %v1198
        %v1230 = vpop.f32.mrf.mxu0
        %v1231 = vadd.f32 %v1194, %v1230
        %v1232 = vpop.f32.mrf.mxu0
        %v1233 = vadd.f32 %v1194, %v1232
        %1234 = vmatmul.bf16.gmra.mxu0 %v1201
        %v1235 = vpop.f32.mrf.mxu0
        %v1236 = vadd.f32 %v1194, %v1235
        %v1237 = vpop.f32.mrf.mxu0
        %v1238 = vadd.f32 %v1194, %v1237
        %1239 = vmatmul.bf16.gmra.mxu0 %v1204
        %v1240 = vpop.f32.mrf.mxu0
        %v1241 = vadd.f32 %v1194, %v1240
        %v1242 = vpop.f32.mrf.mxu0
        %v1243 = vadd.f32 %v1194, %v1242
        %1244 = vmatmul.bf16.gmra.mxu0 %v1207
        %v1245 = vpop.f32.mrf.mxu0
        %v1246 = vadd.f32 %v1194, %v1245
        %v1247 = vpop.f32.mrf.mxu0
        %v1248 = vadd.f32 %v1194, %v1247
        %1249 = vmatmul.bf16.gmra.mxu0 %v1210
        %v1250 = vpop.f32.mrf.mxu0
        %v1251 = vadd.f32 %v1194, %v1250
        %v1252 = vpop.f32.mrf.mxu0
        %v1253 = vadd.f32 %v1194, %v1252
        %1254 = vmatmul.bf16.gmra.mxu0 %v1213
        %v1255 = vpop.f32.mrf.mxu0
        %v1256 = vadd.f32 %v1194, %v1255
        %v1257 = vpop.f32.mrf.mxu0
        %v1258 = vadd.f32 %v1194, %v1257
        %1259 = vmatmul.bf16.gmra.mxu0 %v1216
        %v1260 = vpop.f32.mrf.mxu0
        %v1261 = vadd.f32 %v1194, %v1260
        %v1262 = vpop.f32.mrf.mxu0
        %v1263 = vadd.f32 %v1194, %v1262
        %1264 = vmatmul.bf16.gmra.mxu0 %v1219
        %v1265 = vpop.f32.mrf.mxu0
        %v1266 = vadd.f32 %v1194, %v1265
        %v1267 = vpop.f32.mrf.mxu0
        %v1268 = vadd.f32 %v1194, %v1267
        %1269 = vdwg.mxu0
        %v1270 = vmax.f32 %v1231, 0.0
        %v1271 = vmax.f32 %v1233, 0.0
        %v1272 = vmax.f32 %v1236, 0.0
        %v1273 = vmax.f32 %v1238, 0.0
        %v1274 = vmax.f32 %v1241, 0.0
        %v1275 = vmax.f32 %v1243, 0.0
        %v1276 = vmax.f32 %v1246, 0.0
        %v1277 = vmax.f32 %v1248, 0.0
        %v1278 = vmax.f32 %v1251, 0.0
        %v1279 = vmax.f32 %v1253, 0.0
        %v1280 = vmax.f32 %v1256, 0.0
        %v1281 = vmax.f32 %v1258, 0.0
        %v1282 = vmax.f32 %v1261, 0.0
        %v1283 = vmax.f32 %v1263, 0.0
        %v1284 = vmax.f32 %v1266, 0.0
        %v1285 = vmax.f32 %v1268, 0.0
        %v1286 = vld [vmem:[%s420] sm:$0xff]
        %v1287 = vld [vmem:[%s420 + $0x8] sm:$0xff]
        %v1288 = vld [vmem:[%s420 + $0x10] sm:$0xff]
        %v1289 = vld [vmem:[%s420 + $0x18] sm:$0xff]
        %v1290 = vld [vmem:[%s420 + $0x20] sm:$0xff]
        %v1291 = vld [vmem:[%s420 + $0x28] sm:$0xff]
        %v1292 = vld [vmem:[%s420 + $0x30] sm:$0xff]
        %v1293 = vld [vmem:[%s420 + $0x38] sm:$0xff]
        %v1294 = vld [vmem:[%s420 + $0x40] sm:$0xff]
        %v1295 = vld [vmem:[%s420 + $0x48] sm:$0xff]
        %v1296 = vld [vmem:[%s420 + $0x50] sm:$0xff]
        %v1297 = vld [vmem:[%s420 + $0x58] sm:$0xff]
        %v1298 = vld [vmem:[%s420 + $0x60] sm:$0xff]
        %v1299 = vld [vmem:[%s420 + $0x68] sm:$0xff]
        %v1300 = vld [vmem:[%s420 + $0x70] sm:$0xff]
        %v1301 = vld [vmem:[%s420 + $0x78] sm:$0xff]
        %v1302 = vadd.f32 %v1270, %v1286
        %v1303 = vadd.f32 %v1271, %v1287
        %v1304 = vadd.f32 %v1272, %v1288
        %v1305 = vadd.f32 %v1273, %v1289
        %v1306 = vadd.f32 %v1274, %v1290
        %v1307 = vadd.f32 %v1275, %v1291
        %v1308 = vadd.f32 %v1276, %v1292
        %v1309 = vadd.f32 %v1277, %v1293
        %v1310 = vadd.f32 %v1278, %v1294
        %v1311 = vadd.f32 %v1279, %v1295
        %v1312 = vadd.f32 %v1280, %v1296
        %v1313 = vadd.f32 %v1281, %v1297
        %v1314 = vadd.f32 %v1282, %v1298
        %v1315 = vadd.f32 %v1283, %v1299
        %v1316 = vadd.f32 %v1284, %v1300
        %v1317 = vadd.f32 %v1285, %v1301
        %v1318 = vld [vmem:[%s6] sm:$0xff]
        %v1319 = vld [vmem:[%s6 + $0x8] sm:$0xff]
        %v1320 = vld [vmem:[%s6 + $0x10] sm:$0xff]
        %v1321 = vld [vmem:[%s6 + $0x18] sm:$0xff]
        %v1322 = vpack.c.bf16 %v1303, %v1302
        %v1323 = vpack.c.bf16 %v1305, %v1304
        %v1324 = vpack.c.bf16 %v1307, %v1306
        %v1325 = vpack.c.bf16 %v1309, %v1308
        %v1326 = vpack.c.bf16 %v1311, %v1310
        %v1327 = vpack.c.bf16 %v1313, %v1312
        %v1328 = vpack.c.bf16 %v1315, %v1314
        %v1329 = vpack.c.bf16 %v1317, %v1316
        %v1330 = vpack.c.bf16 %v1319, %v1318
        %v1331 = vpack.c.bf16 %v1321, %v1320
        %v1333 = vsel %vm1132, %v1322, 0
        %v1336 = vsel %vm1132, %v1323, 0
        %v1339 = vsel %vm1132, %v1324, 0
        %v1342 = vsel %vm1132, %v1325, 0
        %v1345 = vsel %vm1132, %v1326, 0
        %v1348 = vsel %vm1132, %v1327, 0
        %v1351 = vsel %vm1132, %v1328, 0
        %v1354 = vsel %vm1132, %v1329, 0
        %1356 = vmatpush.bf16.msra.mxu0 0
        %1357 = vmatpush.bf16.msra.mxu0 0
        %1358 = vmatpush.bf16.msra.mxu0 0
        %1359 = vmatpush.bf16.msra.mxu0 0
        %1360 = vmatpush.bf16.msra.mxu0 0
        %1361 = vmatpush.bf16.msra.mxu0 0
        %1362 = vmatpush.bf16.msra.mxu0 %v1331
        %1363 = vmatpush.bf16.msra.mxu0 %v1330
        %1364 = vmatmul.bf16.gmra.mxu0 %v1333
        %v1365 = vpop.f32.mrf.mxu0
        %v1366 = vadd.f32 0.0, %v1365
        %v1367 = vpop.f32.mrf.mxu0
        %v1368 = vadd.f32 0.0, %v1367
        %1369 = vmatmul.bf16.gmra.mxu0 %v1336
        %v1370 = vpop.f32.mrf.mxu0
        %v1371 = vadd.f32 0.0, %v1370
        %v1372 = vpop.f32.mrf.mxu0
        %v1373 = vadd.f32 0.0, %v1372
        %1374 = vmatmul.bf16.gmra.mxu0 %v1339
        %v1375 = vpop.f32.mrf.mxu0
        %v1376 = vadd.f32 0.0, %v1375
        %v1377 = vpop.f32.mrf.mxu0
        %v1378 = vadd.f32 0.0, %v1377
        %1379 = vmatmul.bf16.gmra.mxu0 %v1342
        %v1380 = vpop.f32.mrf.mxu0
        %v1381 = vadd.f32 0.0, %v1380
        %v1382 = vpop.f32.mrf.mxu0
        %v1383 = vadd.f32 0.0, %v1382
        %1384 = vmatmul.bf16.gmra.mxu0 %v1345
        %v1385 = vpop.f32.mrf.mxu0
        %v1386 = vadd.f32 0.0, %v1385
        %v1387 = vpop.f32.mrf.mxu0
        %v1388 = vadd.f32 0.0, %v1387
        %1389 = vmatmul.bf16.gmra.mxu0 %v1348
        %v1390 = vpop.f32.mrf.mxu0
        %v1391 = vadd.f32 0.0, %v1390
        %v1392 = vpop.f32.mrf.mxu0
        %v1393 = vadd.f32 0.0, %v1392
        %1394 = vmatmul.bf16.gmra.mxu0 %v1351
        %v1395 = vpop.f32.mrf.mxu0
        %v1396 = vadd.f32 0.0, %v1395
        %v1397 = vpop.f32.mrf.mxu0
        %v1398 = vadd.f32 0.0, %v1397
        %1399 = vmatmul.bf16.gmra.mxu0 %v1354
        %v1400 = vpop.f32.mrf.mxu0
        %v1401 = vadd.f32 0.0, %v1400
        %v1402 = vpop.f32.mrf.mxu0
        %v1403 = vadd.f32 0.0, %v1402
        %1404 = vdwg.mxu0
        %v1405 = vtanh.pop %v1366
        %v1406 = vtanh.pop %v1368
        %v1407 = vtanh.pop %v1371
        %v1408 = vtanh.pop %v1373
        %v1409 = vtanh.pop %v1376
        %v1410 = vtanh.pop %v1378
        %v1411 = vtanh.pop %v1381
        %v1412 = vtanh.pop %v1383
        %v1413 = vtanh.pop %v1386
        %v1414 = vtanh.pop %v1388
        %v1415 = vtanh.pop %v1391
        %v1416 = vtanh.pop %v1393
        %v1417 = vtanh.pop %v1396
        %v1418 = vtanh.pop %v1398
        %v1419 = vtanh.pop %v1401
        %v1420 = vtanh.pop %v1403
        %v1421 = vld [vmem:[%s7] sm:$0x1]
        %v1423 = vperm.slane %v1421, 0
        %v1425 = vmul.f32 %v1405, %v1423
        %v1426 = vmul.f32 %v1406, %v1423
        %v1427 = vmul.f32 %v1407, %v1423
        %v1428 = vmul.f32 %v1408, %v1423
        %v1429 = vmul.f32 %v1409, %v1423
        %v1430 = vmul.f32 %v1410, %v1423
        %v1431 = vmul.f32 %v1411, %v1423
        %v1432 = vmul.f32 %v1412, %v1423
        %v1433 = vmul.f32 %v1413, %v1423
        %v1434 = vmul.f32 %v1414, %v1423
        %v1435 = vmul.f32 %v1415, %v1423
        %v1436 = vmul.f32 %v1416, %v1423
        %v1437 = vmul.f32 %v1417, %v1423
        %v1438 = vmul.f32 %v1418, %v1423
        %v1439 = vmul.f32 %v1419, %v1423
        %v1440 = vmul.f32 %v1420, %v1423
        %vm1441 = vcmask 130048
        %v1442 = vsel %vm1441, %v1425, 0.0
        %1443 = vadd.xlane.f32.xlu0 %v1442
        %v1444 = vpop.xlane.xlu0 %1443
        %v1445 = vsel %vm1441, %v1426, 0.0
        %1446 = vadd.xlane.f32.xlu0 %v1445
        %v1447 = vpop.xlane.xlu0 %1446
        %v1448 = vsel %vm1441, %v1427, 0.0
        %1449 = vadd.xlane.f32.xlu0 %v1448
        %v1450 = vpop.xlane.xlu0 %1449
        %v1451 = vsel %vm1441, %v1428, 0.0
        %1452 = vadd.xlane.f32.xlu0 %v1451
        %v1453 = vpop.xlane.xlu0 %1452
        %v1454 = vsel %vm1441, %v1429, 0.0
        %1455 = vadd.xlane.f32.xlu0 %v1454
        %v1456 = vpop.xlane.xlu0 %1455
        %v1457 = vsel %vm1441, %v1430, 0.0
        %1458 = vadd.xlane.f32.xlu0 %v1457
        %v1459 = vpop.xlane.xlu0 %1458
        %v1460 = vsel %vm1441, %v1431, 0.0
        %1461 = vadd.xlane.f32.xlu0 %v1460
        %v1462 = vpop.xlane.xlu0 %1461
        %v1463 = vsel %vm1441, %v1432, 0.0
        %1464 = vadd.xlane.f32.xlu0 %v1463
        %v1465 = vpop.xlane.xlu0 %1464
        %v1466 = vsel %vm1441, %v1433, 0.0
        %1467 = vadd.xlane.f32.xlu0 %v1466
        %v1468 = vpop.xlane.xlu0 %1467
        %v1469 = vsel %vm1441, %v1434, 0.0
        %1470 = vadd.xlane.f32.xlu0 %v1469
        %v1471 = vpop.xlane.xlu0 %1470
        %v1472 = vsel %vm1441, %v1435, 0.0
        %1473 = vadd.xlane.f32.xlu0 %v1472
        %v1474 = vpop.xlane.xlu0 %1473
        %v1475 = vsel %vm1441, %v1436, 0.0
        %1476 = vadd.xlane.f32.xlu0 %v1475
        %v1477 = vpop.xlane.xlu0 %1476
        %v1478 = vsel %vm1441, %v1437, 0.0
        %1479 = vadd.xlane.f32.xlu0 %v1478
        %v1480 = vpop.xlane.xlu0 %1479
        %v1481 = vsel %vm1441, %v1438, 0.0
        %1482 = vadd.xlane.f32.xlu0 %v1481
        %v1483 = vpop.xlane.xlu0 %1482
        %v1484 = vsel %vm1441, %v1439, 0.0
        %1485 = vadd.xlane.f32.xlu0 %v1484
        %v1486 = vpop.xlane.xlu0 %1485
        %v1487 = vsel %vm1441, %v1440, 0.0
        %1488 = vadd.xlane.f32.xlu0 %v1487
        %v1489 = vpop.xlane.xlu0 %1488
        %v1506 = vlaneseq
        %v1507 = vand.u32 %v1506, 127
        %v1508 = vperm.slane %v1444, %v1507
        %v1509 = vadd.s32 %v1507, 4294967288
        %v1510 = vperm.slane %v1447, %v1509
        %vm1511 = vcmask 130112
        %v1512 = vsel %vm1511, %v1510, %v1508
        %v1513 = vperm.slane %v1450, %v1507
        %v1514 = vperm.slane %v1453, %v1509
        %v1515 = vsel %vm1511, %v1514, %v1513
        %v1516 = vperm.slane %v1456, %v1507
        %v1517 = vperm.slane %v1459, %v1509
        %v1518 = vsel %vm1511, %v1517, %v1516
        %v1519 = vperm.slane %v1462, %v1507
        %v1520 = vperm.slane %v1465, %v1509
        %v1521 = vsel %vm1511, %v1520, %v1519
        %v1522 = vperm.slane %v1468, %v1507
        %v1523 = vperm.slane %v1471, %v1509
        %v1524 = vsel %vm1511, %v1523, %v1522
        %v1525 = vperm.slane %v1474, %v1507
        %v1526 = vperm.slane %v1477, %v1509
        %v1527 = vsel %vm1511, %v1526, %v1525
        %v1528 = vperm.slane %v1480, %v1507
        %v1529 = vperm.slane %v1483, %v1509
        %v1530 = vsel %vm1511, %v1529, %v1528
        %v1531 = vperm.slane %v1486, %v1507
        %v1532 = vperm.slane %v1489, %v1509
        %v1533 = vsel %vm1511, %v1532, %v1531
        %vm1534 = vcmask 1041409
        %v1535 = vsel %vm1534, %v1515, %v1512
        %vm1536 = vcmask 1042434
        %v1537 = vsel %vm1536, %v1518, %v1535
        %vm1538 = vcmask 1043459
        %v1539 = vsel %vm1538, %v1521, %v1537
        %vm1540 = vcmask 1044484
        %v1541 = vsel %vm1540, %v1524, %v1539
        %vm1542 = vcmask 1045509
        %v1543 = vsel %vm1542, %v1527, %v1541
        %vm1544 = vcmask 1046534
        %v1545 = vsel %vm1544, %v1530, %v1543
        %vm1546 = vcmask 1047559
        %v1547 = vsel %vm1546, %v1533, %v1545
        %v1549 = vsel %vm1441, %v1547, -inf
        %1550 = vmax.xlane.f32.xlu0 %v1549
        %v1551 = vpop.xlane.xlu0 %1550
        %v1553 = vperm.slane %v1551, 0
        %v1554 = vperm.slane %v1551, 1
        %v1555 = vperm.slane %v1551, 2
        %v1556 = vperm.slane %v1551, 3
        %v1557 = vperm.slane %v1551, 4
        %v1558 = vperm.slane %v1551, 5
        %v1559 = vperm.slane %v1551, 6
        %v1560 = vperm.slane %v1551, 7
        %v1569 = vsub.f32 %v1444, %v1553
        %v1570 = vsub.f32 %v1447, %v1553
        %v1571 = vsub.f32 %v1450, %v1554
        %v1572 = vsub.f32 %v1453, %v1554
        %v1573 = vsub.f32 %v1456, %v1555
        %v1574 = vsub.f32 %v1459, %v1555
        %v1575 = vsub.f32 %v1462, %v1556
        %v1576 = vsub.f32 %v1465, %v1556
        %v1577 = vsub.f32 %v1468, %v1557
        %v1578 = vsub.f32 %v1471, %v1557
        %v1579 = vsub.f32 %v1474, %v1558
        %v1580 = vsub.f32 %v1477, %v1558
        %v1581 = vsub.f32 %v1480, %v1559
        %v1582 = vsub.f32 %v1483, %v1559
        %v1583 = vsub.f32 %v1486, %v1560
        %v1584 = vsub.f32 %v1489, %v1560
        %v1585 = vmul.f32 %v1569, 1.442695
        %v1586 = vpow.pop %v1585
        %v1587 = vmul.f32 %v1570, 1.442695
        %v1588 = vpow.pop %v1587
        %v1589 = vmul.f32 %v1571, 1.442695
        %v1590 = vpow.pop %v1589
        %v1591 = vmul.f32 %v1572, 1.442695
        %v1592 = vpow.pop %v1591
        %v1593 = vmul.f32 %v1573, 1.442695
        %v1594 = vpow.pop %v1593
        %v1595 = vmul.f32 %v1574, 1.442695
        %v1596 = vpow.pop %v1595
        %v1597 = vmul.f32 %v1575, 1.442695
        %v1598 = vpow.pop %v1597
        %v1599 = vmul.f32 %v1576, 1.442695
        %v1600 = vpow.pop %v1599
        %v1601 = vmul.f32 %v1577, 1.442695
        %v1602 = vpow.pop %v1601
        %v1603 = vmul.f32 %v1578, 1.442695
        %v1604 = vpow.pop %v1603
        %v1605 = vmul.f32 %v1579, 1.442695
        %v1606 = vpow.pop %v1605
        %v1607 = vmul.f32 %v1580, 1.442695
        %v1608 = vpow.pop %v1607
        %v1609 = vmul.f32 %v1581, 1.442695
        %v1610 = vpow.pop %v1609
        %v1611 = vmul.f32 %v1582, 1.442695
        %v1612 = vpow.pop %v1611
        %v1613 = vmul.f32 %v1583, 1.442695
        %v1614 = vpow.pop %v1613
        %v1615 = vmul.f32 %v1584, 1.442695
        %v1616 = vpow.pop %v1615
        %1633 = vset.pattern.permute.xlu0 0
        %1634 = vperm.xlu0 %1633, %v1586
        %v1635 = vpop.permute.xlu0 %1634
        %1636 = vset.pattern.permute.xlu0 0
        %1637 = vperm.xlu0 %1636, %v1588
        %v1638 = vpop.permute.xlu0 %1637
        %1639 = vset.pattern.permute.xlu0 0
        %1640 = vperm.xlu0 %1639, %v1590
        %v1641 = vpop.permute.xlu0 %1640
        %1642 = vset.pattern.permute.xlu0 0
        %1643 = vperm.xlu0 %1642, %v1592
        %v1644 = vpop.permute.xlu0 %1643
        %1645 = vset.pattern.permute.xlu0 0
        %1646 = vperm.xlu0 %1645, %v1594
        %v1647 = vpop.permute.xlu0 %1646
        %1648 = vset.pattern.permute.xlu0 0
        %1649 = vperm.xlu0 %1648, %v1596
        %v1650 = vpop.permute.xlu0 %1649
        %1651 = vset.pattern.permute.xlu0 0
        %1652 = vperm.xlu0 %1651, %v1598
        %v1653 = vpop.permute.xlu0 %1652
        %1654 = vset.pattern.permute.xlu0 0
        %1655 = vperm.xlu0 %1654, %v1600
        %v1656 = vpop.permute.xlu0 %1655
        %1657 = vset.pattern.permute.xlu0 0
        %1658 = vperm.xlu0 %1657, %v1602
        %v1659 = vpop.permute.xlu0 %1658
        %1660 = vset.pattern.permute.xlu0 0
        %1661 = vperm.xlu0 %1660, %v1604
        %v1662 = vpop.permute.xlu0 %1661
        %1663 = vset.pattern.permute.xlu0 0
        %1664 = vperm.xlu0 %1663, %v1606
        %v1665 = vpop.permute.xlu0 %1664
        %1666 = vset.pattern.permute.xlu0 0
        %1667 = vperm.xlu0 %1666, %v1608
        %v1668 = vpop.permute.xlu0 %1667
        %1669 = vset.pattern.permute.xlu0 0
        %1670 = vperm.xlu0 %1669, %v1610
        %v1671 = vpop.permute.xlu0 %1670
        %1672 = vset.pattern.permute.xlu0 0
        %1673 = vperm.xlu0 %1672, %v1612
        %v1674 = vpop.permute.xlu0 %1673
        %1675 = vset.pattern.permute.xlu0 0
        %1676 = vperm.xlu0 %1675, %v1614
        %v1677 = vpop.permute.xlu0 %1676
        %1678 = vset.pattern.permute.xlu0 0
        %1679 = vperm.xlu0 %1678, %v1616
        %v1680 = vpop.permute.xlu0 %1679
        %v1681 = vperm.slane %v1635, %v1507
        %v1682 = vperm.slane %v1638, %v1509
        %v1683 = vsel %vm1511, %v1682, %v1681
        %v1684 = vperm.slane %v1641, %v1507
        %v1685 = vperm.slane %v1644, %v1509
        %v1686 = vsel %vm1511, %v1685, %v1684
        %v1687 = vperm.slane %v1647, %v1507
        %v1688 = vperm.slane %v1650, %v1509
        %v1689 = vsel %vm1511, %v1688, %v1687
        %v1690 = vperm.slane %v1653, %v1507
        %v1691 = vperm.slane %v1656, %v1509
        %v1692 = vsel %vm1511, %v1691, %v1690
        %v1693 = vperm.slane %v1659, %v1507
        %v1694 = vperm.slane %v1662, %v1509
        %v1695 = vsel %vm1511, %v1694, %v1693
        %v1696 = vperm.slane %v1665, %v1507
        %v1697 = vperm.slane %v1668, %v1509
        %v1698 = vsel %vm1511, %v1697, %v1696
        %v1699 = vperm.slane %v1671, %v1507
        %v1700 = vperm.slane %v1674, %v1509
        %v1701 = vsel %vm1511, %v1700, %v1699
        %v1702 = vperm.slane %v1677, %v1507
        %v1703 = vperm.slane %v1680, %v1509
        %v1704 = vsel %vm1511, %v1703, %v1702
        %v1705 = vsel %vm1534, %v1686, %v1683
        %v1706 = vsel %vm1536, %v1689, %v1705
        %v1707 = vsel %vm1538, %v1692, %v1706
        %v1708 = vsel %vm1540, %v1695, %v1707
        %v1709 = vsel %vm1542, %v1698, %v1708
        %v1710 = vsel %vm1544, %v1701, %v1709
        %v1711 = vsel %vm1546, %v1704, %v1710
        %v1713 = vsel %vm1441, %v1711, 0.0
        %1714 = vadd.xlane.f32.xlu0 %v1713
        %v1715 = vpop.xlane.xlu0 %1714
        %v1716 = vrcp.pop %v1715
        %v1718 = vperm.slane %v1716, 0
        %v1719 = vperm.slane %v1716, 1
        %v1720 = vperm.slane %v1716, 2
        %v1721 = vperm.slane %v1716, 3
        %v1722 = vperm.slane %v1716, 4
        %v1723 = vperm.slane %v1716, 5
        %v1724 = vperm.slane %v1716, 6
        %v1725 = vperm.slane %v1716, 7
        %v1734 = vmul.f32 %v1586, %v1718
        %v1735 = vmul.f32 %v1588, %v1718
        %v1736 = vmul.f32 %v1590, %v1719
        %v1737 = vmul.f32 %v1592, %v1719
        %v1738 = vmul.f32 %v1594, %v1720
        %v1739 = vmul.f32 %v1596, %v1720
        %v1740 = vmul.f32 %v1598, %v1721
        %v1741 = vmul.f32 %v1600, %v1721
        %v1742 = vmul.f32 %v1602, %v1722
        %v1743 = vmul.f32 %v1604, %v1722
        %v1744 = vmul.f32 %v1606, %v1723
        %v1745 = vmul.f32 %v1608, %v1723
        %v1746 = vmul.f32 %v1610, %v1724
        %v1747 = vmul.f32 %v1612, %v1724
        %v1748 = vmul.f32 %v1614, %v1725
        %v1749 = vmul.f32 %v1616, %v1725
        %v1750 = vpack.c.bf16 %v1734, %v1734
        %v1751 = vpack.c.bf16 %v1735, %v1735
        %v1752 = vpack.c.bf16 %v1736, %v1736
        %v1753 = vpack.c.bf16 %v1737, %v1737
        %v1754 = vpack.c.bf16 %v1738, %v1738
        %v1755 = vpack.c.bf16 %v1739, %v1739
        %v1756 = vpack.c.bf16 %v1740, %v1740
        %v1757 = vpack.c.bf16 %v1741, %v1741
        %v1758 = vpack.c.bf16 %v1742, %v1742
        %v1759 = vpack.c.bf16 %v1743, %v1743
        %v1760 = vpack.c.bf16 %v1744, %v1744
        %v1761 = vpack.c.bf16 %v1745, %v1745
        %v1762 = vpack.c.bf16 %v1746, %v1746
        %v1763 = vpack.c.bf16 %v1747, %v1747
        %v1764 = vpack.c.bf16 %v1748, %v1748
        %v1765 = vpack.c.bf16 %v1749, %v1749
        %v1766 = vpack.c.bf16 %v1302, %v1302
        %v1767 = vpack.c.bf16 %v1303, %v1303
        %v1768 = vpack.c.bf16 %v1304, %v1304
        %v1769 = vpack.c.bf16 %v1305, %v1305
        %v1770 = vpack.c.bf16 %v1306, %v1306
        %v1771 = vpack.c.bf16 %v1307, %v1307
        %v1772 = vpack.c.bf16 %v1308, %v1308
        %v1773 = vpack.c.bf16 %v1309, %v1309
        %v1774 = vpack.c.bf16 %v1310, %v1310
        %v1775 = vpack.c.bf16 %v1311, %v1311
        %v1776 = vpack.c.bf16 %v1312, %v1312
        %v1777 = vpack.c.bf16 %v1313, %v1313
        %v1778 = vpack.c.bf16 %v1314, %v1314
        %v1779 = vpack.c.bf16 %v1315, %v1315
        %v1780 = vpack.c.bf16 %v1316, %v1316
        %v1781 = vpack.c.bf16 %v1317, %v1317
        %v1784 = vunpack.c.l.b16 %v1750
        %v1785 = vunpack.c.l.b16 %v1751
        %v1786 = vpack.c.b16 %v1785, %v1784
        %v1787 = vunpack.c.l.b16 %v1786
        %v1788 = vunpack.c.h.b16 %v1786
        %1789 = vset.pattern.permute.xlu0 0
        %1790 = vperm.xlu0 %1789, %v1787
        %v1791 = vpop.permute.xlu0 %1790
        %1792 = vset.pattern.permute.xlu0 0
        %1793 = vperm.xlu0 %1792, %v1788
        %v1794 = vpop.permute.xlu0 %1793
        %v1795 = vperm.slane %v1791, %v1507
        %v1796 = vperm.slane %v1794, %v1509
        %v1797 = vsel %vm1511, %v1796, %v1795
        %v1798 = vpack.c.b16 %v1797, %v1797
        %v1801 = vunpack.c.l.b16 %v1766
        %v1802 = vunpack.c.l.b16 %v1767
        %v1803 = vpack.c.b16 %v1802, %v1801
        %v1806 = vsel %vm1441, %v1798, 0
        %1808 = vmatpush.bf16.msra.mxu0 0
        %1809 = vmatpush.bf16.msra.mxu0 0
        %1810 = vmatpush.bf16.msra.mxu0 0
        %1811 = vmatpush.bf16.msra.mxu0 0
        %1812 = vmatpush.bf16.msra.mxu0 0
        %1813 = vmatpush.bf16.msra.mxu0 0
        %1814 = vmatpush.bf16.msra.mxu0 0
        %1815 = vmatpush.bf16.msra.mxu0 %v1803
        %1816 = vmatmul.bf16.gmra.mxu0 %v1806
        %v1817 = vpop.f32.mrf.mxu0
        %v1818 = vadd.f32 0.0, %v1817
        %v1819 = vpop.f32.mrf.mxu0
        %1820 = vdwg.mxu0
        %v1823 = vunpack.c.l.b16 %v1752
        %v1824 = vunpack.c.l.b16 %v1753
        %v1825 = vpack.c.b16 %v1824, %v1823
        %v1826 = vunpack.c.l.b16 %v1825
        %v1827 = vunpack.c.h.b16 %v1825
        %1828 = vset.pattern.permute.xlu0 0
        %1829 = vperm.xlu0 %1828, %v1826
        %v1830 = vpop.permute.xlu0 %1829
        %1831 = vset.pattern.permute.xlu0 0
        %1832 = vperm.xlu0 %1831, %v1827
        %v1833 = vpop.permute.xlu0 %1832
        %v1834 = vperm.slane %v1830, %v1507
        %v1835 = vperm.slane %v1833, %v1509
        %v1836 = vsel %vm1511, %v1835, %v1834
        %v1837 = vpack.c.b16 %v1836, %v1836
        %v1840 = vunpack.c.l.b16 %v1768
        %v1841 = vunpack.c.l.b16 %v1769
        %v1842 = vpack.c.b16 %v1841, %v1840
        %v1845 = vsel %vm1441, %v1837, 0
        %1847 = vmatpush.bf16.msra.mxu0 0
        %1848 = vmatpush.bf16.msra.mxu0 0
        %1849 = vmatpush.bf16.msra.mxu0 0
        %1850 = vmatpush.bf16.msra.mxu0 0
        %1851 = vmatpush.bf16.msra.mxu0 0
        %1852 = vmatpush.bf16.msra.mxu0 0
        %1853 = vmatpush.bf16.msra.mxu0 0
        %1854 = vmatpush.bf16.msra.mxu0 %v1842
        %1855 = vmatmul.bf16.gmra.mxu0 %v1845
        %v1856 = vpop.f32.mrf.mxu0
        %v1857 = vadd.f32 0.0, %v1856
        %v1858 = vpop.f32.mrf.mxu0
        %1859 = vdwg.mxu0
        %v1862 = vunpack.c.l.b16 %v1754
        %v1863 = vunpack.c.l.b16 %v1755
        %v1864 = vpack.c.b16 %v1863, %v1862
        %v1865 = vunpack.c.l.b16 %v1864
        %v1866 = vunpack.c.h.b16 %v1864
        %1867 = vset.pattern.permute.xlu0 0
        %1868 = vperm.xlu0 %1867, %v1865
        %v1869 = vpop.permute.xlu0 %1868
        %1870 = vset.pattern.permute.xlu0 0
        %1871 = vperm.xlu0 %1870, %v1866
        %v1872 = vpop.permute.xlu0 %1871
        %v1873 = vperm.slane %v1869, %v1507
        %v1874 = vperm.slane %v1872, %v1509
        %v1875 = vsel %vm1511, %v1874, %v1873
        %v1876 = vpack.c.b16 %v1875, %v1875
        %v1879 = vunpack.c.l.b16 %v1770
        %v1880 = vunpack.c.l.b16 %v1771
        %v1881 = vpack.c.b16 %v1880, %v1879
        %v1884 = vsel %vm1441, %v1876, 0
        %1886 = vmatpush.bf16.msra.mxu0 0
        %1887 = vmatpush.bf16.msra.mxu0 0
        %1888 = vmatpush.bf16.msra.mxu0 0
        %1889 = vmatpush.bf16.msra.mxu0 0
        %1890 = vmatpush.bf16.msra.mxu0 0
        %1891 = vmatpush.bf16.msra.mxu0 0
        %1892 = vmatpush.bf16.msra.mxu0 0
        %1893 = vmatpush.bf16.msra.mxu0 %v1881
        %1894 = vmatmul.bf16.gmra.mxu0 %v1884
        %v1895 = vpop.f32.mrf.mxu0
        %v1896 = vadd.f32 0.0, %v1895
        %v1897 = vpop.f32.mrf.mxu0
        %1898 = vdwg.mxu0
        %v1901 = vunpack.c.l.b16 %v1756
        %v1902 = vunpack.c.l.b16 %v1757
        %v1903 = vpack.c.b16 %v1902, %v1901
        %v1904 = vunpack.c.l.b16 %v1903
        %v1905 = vunpack.c.h.b16 %v1903
        %1906 = vset.pattern.permute.xlu0 0
        %1907 = vperm.xlu0 %1906, %v1904
        %v1908 = vpop.permute.xlu0 %1907
        %1909 = vset.pattern.permute.xlu0 0
        %1910 = vperm.xlu0 %1909, %v1905
        %v1911 = vpop.permute.xlu0 %1910
        %v1912 = vperm.slane %v1908, %v1507
        %v1913 = vperm.slane %v1911, %v1509
        %v1914 = vsel %vm1511, %v1913, %v1912
        %v1915 = vpack.c.b16 %v1914, %v1914
        %v1918 = vunpack.c.l.b16 %v1772
        %v1919 = vunpack.c.l.b16 %v1773
        %v1920 = vpack.c.b16 %v1919, %v1918
        %v1923 = vsel %vm1441, %v1915, 0
        %1925 = vmatpush.bf16.msra.mxu0 0
        %1926 = vmatpush.bf16.msra.mxu0 0
        %1927 = vmatpush.bf16.msra.mxu0 0
        %1928 = vmatpush.bf16.msra.mxu0 0
        %1929 = vmatpush.bf16.msra.mxu0 0
        %1930 = vmatpush.bf16.msra.mxu0 0
        %1931 = vmatpush.bf16.msra.mxu0 0
        %1932 = vmatpush.bf16.msra.mxu0 %v1920
        %1933 = vmatmul.bf16.gmra.mxu0 %v1923
        %v1934 = vpop.f32.mrf.mxu0
        %v1935 = vadd.f32 0.0, %v1934
        %v1936 = vpop.f32.mrf.mxu0
        %1937 = vdwg.mxu0
        %v1940 = vunpack.c.l.b16 %v1758
        %v1941 = vunpack.c.l.b16 %v1759
        %v1942 = vpack.c.b16 %v1941, %v1940
        %v1943 = vunpack.c.l.b16 %v1942
        %v1944 = vunpack.c.h.b16 %v1942
        %1945 = vset.pattern.permute.xlu0 0
        %1946 = vperm.xlu0 %1945, %v1943
        %v1947 = vpop.permute.xlu0 %1946
        %1948 = vset.pattern.permute.xlu0 0
        %1949 = vperm.xlu0 %1948, %v1944
        %v1950 = vpop.permute.xlu0 %1949
        %v1951 = vperm.slane %v1947, %v1507
        %v1952 = vperm.slane %v1950, %v1509
        %v1953 = vsel %vm1511, %v1952, %v1951
        %v1954 = vpack.c.b16 %v1953, %v1953
        %v1957 = vunpack.c.l.b16 %v1774
        %v1958 = vunpack.c.l.b16 %v1775
        %v1959 = vpack.c.b16 %v1958, %v1957
        %v1962 = vsel %vm1441, %v1954, 0
        %1964 = vmatpush.bf16.msra.mxu0 0
        %1965 = vmatpush.bf16.msra.mxu0 0
        %1966 = vmatpush.bf16.msra.mxu0 0
        %1967 = vmatpush.bf16.msra.mxu0 0
        %1968 = vmatpush.bf16.msra.mxu0 0
        %1969 = vmatpush.bf16.msra.mxu0 0
        %1970 = vmatpush.bf16.msra.mxu0 0
        %1971 = vmatpush.bf16.msra.mxu0 %v1959
        %1972 = vmatmul.bf16.gmra.mxu0 %v1962
        %v1973 = vpop.f32.mrf.mxu0
        %v1974 = vadd.f32 0.0, %v1973
        %v1975 = vpop.f32.mrf.mxu0
        %1976 = vdwg.mxu0
        %v1979 = vunpack.c.l.b16 %v1760
        %v1980 = vunpack.c.l.b16 %v1761
        %v1981 = vpack.c.b16 %v1980, %v1979
        %v1982 = vunpack.c.l.b16 %v1981
        %v1983 = vunpack.c.h.b16 %v1981
        %1984 = vset.pattern.permute.xlu0 0
        %1985 = vperm.xlu0 %1984, %v1982
        %v1986 = vpop.permute.xlu0 %1985
        %1987 = vset.pattern.permute.xlu0 0
        %1988 = vperm.xlu0 %1987, %v1983
        %v1989 = vpop.permute.xlu0 %1988
        %v1990 = vperm.slane %v1986, %v1507
        %v1991 = vperm.slane %v1989, %v1509
        %v1992 = vsel %vm1511, %v1991, %v1990
        %v1993 = vpack.c.b16 %v1992, %v1992
        %v1996 = vunpack.c.l.b16 %v1776
        %v1997 = vunpack.c.l.b16 %v1777
        %v1998 = vpack.c.b16 %v1997, %v1996
        %v2001 = vsel %vm1441, %v1993, 0
        %2003 = vmatpush.bf16.msra.mxu0 0
        %2004 = vmatpush.bf16.msra.mxu0 0
        %2005 = vmatpush.bf16.msra.mxu0 0
        %2006 = vmatpush.bf16.msra.mxu0 0
        %2007 = vmatpush.bf16.msra.mxu0 0
        %2008 = vmatpush.bf16.msra.mxu0 0
        %2009 = vmatpush.bf16.msra.mxu0 0
        %2010 = vmatpush.bf16.msra.mxu0 %v1998
        %2011 = vmatmul.bf16.gmra.mxu0 %v2001
        %v2012 = vpop.f32.mrf.mxu0
        %v2013 = vadd.f32 0.0, %v2012
        %v2014 = vpop.f32.mrf.mxu0
        %2015 = vdwg.mxu0
        %v2018 = vunpack.c.l.b16 %v1762
        %v2019 = vunpack.c.l.b16 %v1763
        %v2020 = vpack.c.b16 %v2019, %v2018
        %v2021 = vunpack.c.l.b16 %v2020
        %v2022 = vunpack.c.h.b16 %v2020
        %2023 = vset.pattern.permute.xlu0 0
        %2024 = vperm.xlu0 %2023, %v2021
        %v2025 = vpop.permute.xlu0 %2024
        %2026 = vset.pattern.permute.xlu0 0
        %2027 = vperm.xlu0 %2026, %v2022
        %v2028 = vpop.permute.xlu0 %2027
        %v2029 = vperm.slane %v2025, %v1507
        %v2030 = vperm.slane %v2028, %v1509
        %v2031 = vsel %vm1511, %v2030, %v2029
        %v2032 = vpack.c.b16 %v2031, %v2031
        %v2035 = vunpack.c.l.b16 %v1778
        %v2036 = vunpack.c.l.b16 %v1779
        %v2037 = vpack.c.b16 %v2036, %v2035
        %v2040 = vsel %vm1441, %v2032, 0
        %2042 = vmatpush.bf16.msra.mxu0 0
        %2043 = vmatpush.bf16.msra.mxu0 0
        %2044 = vmatpush.bf16.msra.mxu0 0
        %2045 = vmatpush.bf16.msra.mxu0 0
        %2046 = vmatpush.bf16.msra.mxu0 0
        %2047 = vmatpush.bf16.msra.mxu0 0
        %2048 = vmatpush.bf16.msra.mxu0 0
        %2049 = vmatpush.bf16.msra.mxu0 %v2037
        %2050 = vmatmul.bf16.gmra.mxu0 %v2040
        %v2051 = vpop.f32.mrf.mxu0
        %v2052 = vadd.f32 0.0, %v2051
        %v2053 = vpop.f32.mrf.mxu0
        %2054 = vdwg.mxu0
        %v2057 = vunpack.c.l.b16 %v1764
        %v2058 = vunpack.c.l.b16 %v1765
        %v2059 = vpack.c.b16 %v2058, %v2057
        %v2060 = vunpack.c.l.b16 %v2059
        %v2061 = vunpack.c.h.b16 %v2059
        %2062 = vset.pattern.permute.xlu0 0
        %2063 = vperm.xlu0 %2062, %v2060
        %v2064 = vpop.permute.xlu0 %2063
        %2065 = vset.pattern.permute.xlu0 0
        %2066 = vperm.xlu0 %2065, %v2061
        %v2067 = vpop.permute.xlu0 %2066
        %v2068 = vperm.slane %v2064, %v1507
        %v2069 = vperm.slane %v2067, %v1509
        %v2070 = vsel %vm1511, %v2069, %v2068
        %v2071 = vpack.c.b16 %v2070, %v2070
        %v2074 = vunpack.c.l.b16 %v1780
        %v2075 = vunpack.c.l.b16 %v1781
        %v2076 = vpack.c.b16 %v2075, %v2074
        %v2079 = vsel %vm1441, %v2071, 0
        %2081 = vmatpush.bf16.msra.mxu0 0
        %2082 = vmatpush.bf16.msra.mxu0 0
        %2083 = vmatpush.bf16.msra.mxu0 0
        %2084 = vmatpush.bf16.msra.mxu0 0
        %2085 = vmatpush.bf16.msra.mxu0 0
        %2086 = vmatpush.bf16.msra.mxu0 0
        %2087 = vmatpush.bf16.msra.mxu0 0
        %2088 = vmatpush.bf16.msra.mxu0 %v2076
        %2089 = vmatmul.bf16.gmra.mxu0 %v2079
        %v2090 = vpop.f32.mrf.mxu0
        %v2091 = vadd.f32 0.0, %v2090
        %v2092 = vpop.f32.mrf.mxu0
        %2093 = vdwg.mxu0
        %v2094 = vld [vmem:[%s8] sm:$0xff]
        %v2095 = vld [vmem:[%s8 + $0x8] sm:$0xff]
        %v2096 = vld [vmem:[%s8 + $0x10] sm:$0xff]
        %v2097 = vld [vmem:[%s8 + $0x18] sm:$0xff]
        %v2098 = vpack.c.bf16 %v1818, %v1818
        %v2099 = vpack.c.bf16 %v1857, %v1857
        %v2100 = vpack.c.bf16 %v1896, %v1896
        %v2101 = vpack.c.bf16 %v1935, %v1935
        %v2102 = vpack.c.bf16 %v1974, %v1974
        %v2103 = vpack.c.bf16 %v2013, %v2013
        %v2104 = vpack.c.bf16 %v2052, %v2052
        %v2105 = vpack.c.bf16 %v2091, %v2091
        %v2106 = vpack.c.bf16 %v2095, %v2094
        %v2107 = vpack.c.bf16 %v2097, %v2096
        %v2108 = vld [vmem:[%s9] sm:$0x1]
        %v2110 = vperm.slane %v2108, 0
        %v2120 = vunpack.c.l.b16 %v2098
        %v2121 = vunpack.c.l.b16 %v2099
        %v2122 = vunpack.c.l.b16 %v2100
        %v2123 = vunpack.c.l.b16 %v2101
        %v2124 = vunpack.c.l.b16 %v2102
        %v2125 = vunpack.c.l.b16 %v2103
        %v2126 = vunpack.c.l.b16 %v2104
        %v2127 = vunpack.c.l.b16 %v2105
        %v2128 = vrot.slane %v2121, 7
        %v2129 = vsel %vm1534, %v2128, %v2120
        %v2130 = vrot.slane %v2122, 6
        %v2131 = vsel %vm1536, %v2130, %v2129
        %v2132 = vrot.slane %v2123, 5
        %v2133 = vsel %vm1538, %v2132, %v2131
        %v2134 = vrot.slane %v2124, 4
        %v2135 = vsel %vm1540, %v2134, %v2133
        %v2136 = vrot.slane %v2125, 3
        %v2137 = vsel %vm1542, %v2136, %v2135
        %v2138 = vrot.slane %v2126, 2
        %v2139 = vsel %vm1544, %v2138, %v2137
        %v2140 = vrot.slane %v2127, 1
        %v2141 = vsel %vm1546, %v2140, %v2139
        %v2142 = vpack.c.b16 %v2141, %v2141
        %v2144 = vsel %vm1132, %v2142, 0
        %2146 = vmatpush.bf16.msra.mxu0 0
        %2147 = vmatpush.bf16.msra.mxu0 0
        %2148 = vmatpush.bf16.msra.mxu0 0
        %2149 = vmatpush.bf16.msra.mxu0 0
        %2150 = vmatpush.bf16.msra.mxu0 0
        %2151 = vmatpush.bf16.msra.mxu0 0
        %2152 = vmatpush.bf16.msra.mxu0 %v2107
        %2153 = vmatpush.bf16.msra.mxu0 %v2106
        %2154 = vmatmul.bf16.gmra.mxu0 %v2144
        %v2155 = vpop.f32.mrf.mxu0
        %v2156 = vadd.f32 %v2110, %v2155
        %v2157 = vpop.f32.mrf.mxu0
        %2158 = vdwg.mxu0
        %vm2159 = vcmask 23552
        %2160 = vst.msk [vmem:[%s425] sm:$0xff] %vm2159, %v2156
        %2177 = vset.pattern.permute.xlu0 0
        %2178 = vperm.xlu0 %2177, %v1734
        %v2179 = vpop.permute.xlu0 %2178
        %2180 = vset.pattern.permute.xlu0 0
        %2181 = vperm.xlu0 %2180, %v1735
        %v2182 = vpop.permute.xlu0 %2181
        %2183 = vset.pattern.permute.xlu0 0
        %2184 = vperm.xlu0 %2183, %v1736
        %v2185 = vpop.permute.xlu0 %2184
        %2186 = vset.pattern.permute.xlu0 0
        %2187 = vperm.xlu0 %2186, %v1737
        %v2188 = vpop.permute.xlu0 %2187
        %2189 = vset.pattern.permute.xlu0 0
        %2190 = vperm.xlu0 %2189, %v1738
        %v2191 = vpop.permute.xlu0 %2190
        %2192 = vset.pattern.permute.xlu0 0
        %2193 = vperm.xlu0 %2192, %v1739
        %v2194 = vpop.permute.xlu0 %2193
        %2195 = vset.pattern.permute.xlu0 0
        %2196 = vperm.xlu0 %2195, %v1740
        %v2197 = vpop.permute.xlu0 %2196
        %2198 = vset.pattern.permute.xlu0 0
        %2199 = vperm.xlu0 %2198, %v1741
        %v2200 = vpop.permute.xlu0 %2199
        %2201 = vset.pattern.permute.xlu0 0
        %2202 = vperm.xlu0 %2201, %v1742
        %v2203 = vpop.permute.xlu0 %2202
        %2204 = vset.pattern.permute.xlu0 0
        %2205 = vperm.xlu0 %2204, %v1743
        %v2206 = vpop.permute.xlu0 %2205
        %2207 = vset.pattern.permute.xlu0 0
        %2208 = vperm.xlu0 %2207, %v1744
        %v2209 = vpop.permute.xlu0 %2208
        %2210 = vset.pattern.permute.xlu0 0
        %2211 = vperm.xlu0 %2210, %v1745
        %v2212 = vpop.permute.xlu0 %2211
        %2213 = vset.pattern.permute.xlu0 0
        %2214 = vperm.xlu0 %2213, %v1746
        %v2215 = vpop.permute.xlu0 %2214
        %2216 = vset.pattern.permute.xlu0 0
        %2217 = vperm.xlu0 %2216, %v1747
        %v2218 = vpop.permute.xlu0 %2217
        %2219 = vset.pattern.permute.xlu0 0
        %2220 = vperm.xlu0 %2219, %v1748
        %v2221 = vpop.permute.xlu0 %2220
        %2222 = vset.pattern.permute.xlu0 0
        %2223 = vperm.xlu0 %2222, %v1749
        %v2224 = vpop.permute.xlu0 %2223
        %v2225 = vperm.slane %v2179, %v1507
        %v2226 = vperm.slane %v2182, %v1509
        %v2227 = vsel %vm1511, %v2226, %v2225
        %v2228 = vperm.slane %v2185, %v1507
        %v2229 = vperm.slane %v2188, %v1509
        %v2230 = vsel %vm1511, %v2229, %v2228
        %v2231 = vperm.slane %v2191, %v1507
        %v2232 = vperm.slane %v2194, %v1509
        %v2233 = vsel %vm1511, %v2232, %v2231
        %v2234 = vperm.slane %v2197, %v1507
        %v2235 = vperm.slane %v2200, %v1509
        %v2236 = vsel %vm1511, %v2235, %v2234
        %v2237 = vperm.slane %v2203, %v1507
        %v2238 = vperm.slane %v2206, %v1509
        %v2239 = vsel %vm1511, %v2238, %v2237
        %v2240 = vperm.slane %v2209, %v1507
        %v2241 = vperm.slane %v2212, %v1509
        %v2242 = vsel %vm1511, %v2241, %v2240
        %v2243 = vperm.slane %v2215, %v1507
        %v2244 = vperm.slane %v2218, %v1509
        %v2245 = vsel %vm1511, %v2244, %v2243
        %v2246 = vperm.slane %v2221, %v1507
        %v2247 = vperm.slane %v2224, %v1509
        %v2248 = vsel %vm1511, %v2247, %v2246
        %v2249 = vsel %vm1534, %v2230, %v2227
        %v2250 = vsel %vm1536, %v2233, %v2249
        %v2251 = vsel %vm1538, %v2236, %v2250
        %v2252 = vsel %vm1540, %v2239, %v2251
        %v2253 = vsel %vm1542, %v2242, %v2252
        %v2254 = vsel %vm1544, %v2245, %v2253
        %v2255 = vsel %vm1546, %v2248, %v2254
        %2257 = vst.msk [vmem:[%s407] sm:$0xff] %vm1441, %v2255
        %p2258 = scmp.lt.s32.totalorder %s26, 1
        %s2259 = scalar_select %p2258, %s26, 1
        %s2260 = smul.addr %s2259, 8
        %s2261 = scalar_lea.vmem %s10, %s2260
        %s2262 = sand.u32 %s280, 1
        %s2263 = scalar_lea.sflag [#allocation3], %s2262
        %s2264 = sand.u32 %s280, 1
        %s2265 = smul.addr %s2264, 8
        %s2266 = scalar_lea.vmem [#allocation2], %s2265
        // Predicated region
        $region61: #{tpu_custom_call.1} parent=59 // pred_check
          %p2267 = pneg %p264
        $region62: #{tpu_custom_call.1} parent=59 // pred_check_branch
          %2269 = sbr.rel (%p2267) target = $region64
        $region63: #{tpu_custom_call.1} parent=59 // pred_region
          _
        $region64: #{tpu_custom_call.1} parent=59 // pred_fallthru
          _
        // Predicated region
        $region65: #{tpu_custom_call.1} parent=59 // pred_check
          %p2270 = pneg %p290
        $region66: #{tpu_custom_call.1} parent=59 // pred_check_branch
          %2272 = sbr.rel (%p2270) target = $region68
        $region67: #{tpu_custom_call.1} parent=59 // pred_region
          %2274 = vsyncadd %s2263, 0
          %s2275 = smul.addr %s26, 8
          %s2276 = scalar_lea.hbm %s11, %s2275
          %s2278 = sshll.u32 %s2266, 4
          %s2279 = int_to_ptr.vmem [resolvable:$true] %s2278
          %s2280 = sshll.u32 %s2276, 4
          %s2281 = int_to_ptr.hbm [resolvable:$true] %s2280
          %2283 = dma.vmem_to_hbm [thread:$0]  %s2279, 128, %s2281, %s2263
        $region68: #{tpu_custom_call.1} parent=59 // pred_fallthru
          _
      $region60: #{tpu_custom_call.1} parent=5 // pred_fallthru
        _
      %p2284 = scmp.le.s32.totalorder 2, %s21
      // Predicated region
      $region69: #{tpu_custom_call.1} parent=5 // pred_check
        %p2285 = pneg %p2284
      $region70: #{tpu_custom_call.1} parent=5 // pred_check_branch
        %2287 = sbr.rel (%p2285) target = $region72
      $region71: #{tpu_custom_call.1} parent=5 // pred_region
        %s2288 = ssub.s32 %s21, 2
        // Predicated region
        $region73: #{tpu_custom_call.1} parent=71 // pred_check
          %p2289 = pneg %p270
        $region74: #{tpu_custom_call.1} parent=71 // pred_check_branch
          %2291 = sbr.rel (%p2289) target = $region76
        $region75: #{tpu_custom_call.1} parent=71 // pred_region
          %p2292 = scmp.lt.s32.totalorder %s27, 1
          %s2293 = scalar_select %p2292, %s27, 1
          %s2294 = smul.addr %s2293, 8
          %s2295 = scalar_lea.vmem %s10, %s2294
        $region76: #{tpu_custom_call.1} parent=71 // pred_fallthru
          _
        // Predicated region
        $region77: #{tpu_custom_call.1} parent=71 // pred_check
          %p2296 = pneg %p296
        $region78: #{tpu_custom_call.1} parent=71 // pred_check_branch
          %2298 = sbr.rel (%p2296) target = $region80
        $region79: #{tpu_custom_call.1} parent=71 // pred_region
          %s2299 = sand.u32 %s281, 1
          %s2300 = scalar_lea.sflag [#allocation3], %s2299
          %s2301 = sand.u32 %s281, 1
          %s2302 = smul.addr %s2301, 8
          %s2303 = scalar_lea.vmem [#allocation2], %s2302
          %2305 = dma.done %s2300, 128
        $region80: #{tpu_custom_call.1} parent=71 // pred_fallthru
          _
      $region72: #{tpu_custom_call.1} parent=5 // pred_fallthru
        _
    $region6: #{tpu_custom_call.1} parent=1 // loop_footer
      %s25 = sadd.s32 1, %s21
    $region7: #{tpu_custom_call.1} parent=1 // loop_footer_branch
      %20 = sbr.rel target = $region3
    $region8: #{tpu_custom_call.1} parent=1 // loop_exit
      _
    %2306 = vsyncpa [#allocation3], 1
    %s2307 = scalar_lea.sflag [#allocation3], 1
    %2308 = vsyncpa %s2307, 1

</llo_original>
